<compile_context>
chip_gen: v6e
topology: v6e:2x2x1
jax: 0.10.0
libtpu: 0.0.40
codegen_flags: <defaults>
</compile_context>

<pallas_src>
from functools import partial

import jax
import jax.numpy as jnp
from jax.experimental import pallas as pl
from jax.experimental.pallas import tpu as pltpu


def _cond_lstm_kernel(T, Bp, H,
                      x_ref, wih_ref, whh_ref, b_ref, h0_ref, c0_ref,
                      w1_ref, b1_ref, w2_ref, b2_ref,
                      out_ref, hT_ref, cT_ref):
    """LSTM recurrence + MLP head, everything register/VMEM resident.

    x_ref   : (T*Bp, Din)   time-major flattened concat(value, noise), batch-padded
    wih_ref : (Din, 4H)     transposed weight_ih, gate columns reordered (i,f,o,g)
    whh_ref : (H, 4H)       transposed weight_hh, same column order
    b_ref   : (1, 4H)       b_ih + b_hh, same column order
    h0/c0   : (Bp, H)       initial states (repeated over batch, zero-padded rows)
    w1/b1   : (H, Mp)/(1, Mp)   first MLP linear, lane-padded to 128
    w2/b2   : (Mp, Op)/(1, Op)  second MLP linear, lane-padded to 128
    out_ref : (T*Bp, Op)    time-major flattened outputs (lane-dense store)
    hT/cT   : (Bp, H)       final hidden / cell state
    """
    # Batched input projection + bias, hoisted out of the serial recurrence.
    xw = (jnp.dot(x_ref[...], wih_ref[...], preferred_element_type=jnp.float32)
          + b_ref[...])                                     # (T*Bp, 4H)
    whh = whh_ref[...]                                      # (H, 4H)

    h = h0_ref[...]                                         # (Bp, H) in vregs
    c = c0_ref[...]

    # Fully unrolled recurrence (T small & static); h/c and per-step hidden
    # states live entirely in registers — no scratch round-trips.
    h_steps = []
    for t in range(T):
        gates = xw[t * Bp:(t + 1) * Bp, :] + jnp.dot(
            h, whh, preferred_element_type=jnp.float32)      # (Bp, 4H)
        sig = jax.nn.sigmoid(gates[:, :3 * H])               # i, f, o together
        i_g = sig[:, 0 * H:1 * H]
        f_g = sig[:, 1 * H:2 * H]
        o_g = sig[:, 2 * H:3 * H]
        g_g = jnp.tanh(gates[:, 3 * H:4 * H])
        c = f_g * c + i_g * g_g
        h = o_g * jnp.tanh(c)
        h_steps.append(h)

    hT_ref[...] = h
    cT_ref[...] = c

    # MLP head on all timesteps at once:
    # Linear(H, Mp) -> LeakyReLU(0.01) -> Linear(Mp, Op), one lane-dense store.
    h_all = jnp.concatenate(h_steps, axis=0)                 # (T*Bp, H)
    z = (jnp.dot(h_all, w1_ref[...], preferred_element_type=jnp.float32)
         + b1_ref[...])                                      # (T*Bp, Mp)
    z = jnp.where(z > 0, z, 0.01 * z)
    out_ref[...] = (jnp.dot(z, w2_ref[...], preferred_element_type=jnp.float32)
                    + b2_ref[...])                           # (T*Bp, Op)


def _reorder_gates(w, H):
    """Permute last-dim gate blocks from PyTorch (i, f, g, o) to (i, f, o, g)."""
    return jnp.concatenate(
        [w[..., :2 * H], w[..., 3 * H:4 * H], w[..., 2 * H:3 * H]], axis=-1)


def cond_lstm_forward(value, noise, params, hidden=None, only_last=False):
    """Pallas implementation of CondLSTM.forward (n_layers == 1)."""
    x = jnp.concatenate([value, noise], axis=2)              # (B, T, Din)
    B, T, Din = x.shape
    H = params["w_hh"].shape[1]
    M = params["w1"].shape[0]
    O = params["w2"].shape[0]

    SUB, LANE = 8, 128
    Bp = ((B + SUB - 1) // SUB) * SUB                        # batch -> sublane granule
    Mp = ((M + LANE - 1) // LANE) * LANE                     # MLP hidden -> lane granule
    Op = ((O + LANE - 1) // LANE) * LANE                     # out features -> lane granule

    if hidden is None:
        h0 = jnp.broadcast_to(params["h_0"][0], (B, H))      # repeat(1, B, 1)[0]
        c0 = jnp.broadcast_to(params["c_0"][0], (B, H))
    else:
        h0, c0 = hidden[0][0], hidden[1][0]

    # Zero-pad batch rows to a full sublane tile; padded rows never leak
    # into real rows (row-independent matmuls) and are sliced off below.
    h0p = jnp.pad(h0.astype(jnp.float32), ((0, Bp - B), (0, 0)))
    c0p = jnp.pad(c0.astype(jnp.float32), ((0, Bp - B), (0, 0)))

    # Time-major flatten (with batch padding) so the input projection is one matmul.
    x_tm = jnp.transpose(x, (1, 0, 2)).astype(jnp.float32)   # (T, B, Din)
    x_tm = jnp.pad(x_tm, ((0, 0), (0, Bp - B), (0, 0)))      # (T, Bp, Din)
    x_flat = x_tm.reshape(T * Bp, Din)

    wih = _reorder_gates(params["w_ih"].T.astype(jnp.float32), H)   # (Din, 4H)
    whh = _reorder_gates(params["w_hh"].T.astype(jnp.float32), H)   # (H, 4H)
    b = _reorder_gates(
        (params["b_ih"] + params["b_hh"]).reshape(1, 4 * H).astype(jnp.float32), H)

    # Zero-pad the MLP to lane-dense shapes (padded lanes produce zeros / are sliced).
    w1 = jnp.pad(params["w1"].T.astype(jnp.float32), ((0, 0), (0, Mp - M)))     # (H, Mp)
    b1 = jnp.pad(params["b1"].reshape(1, M).astype(jnp.float32), ((0, 0), (0, Mp - M)))
    w2 = jnp.pad(params["w2"].T.astype(jnp.float32), ((0, Mp - M), (0, Op - O)))  # (Mp, Op)
    b2 = jnp.pad(params["b2"].reshape(1, O).astype(jnp.float32), ((0, 0), (0, Op - O)))

    kernel = partial(_cond_lstm_kernel, T, Bp, H)
    out_flat, hT, cT = pl.pallas_call(
        kernel,
        out_shape=(jax.ShapeDtypeStruct((T * Bp, Op), jnp.float32),
                   jax.ShapeDtypeStruct((Bp, H), jnp.float32),
                   jax.ShapeDtypeStruct((Bp, H), jnp.float32)),
        in_specs=[pl.BlockSpec(memory_space=pltpu.MemorySpace.VMEM)] * 10,
        out_specs=(pl.BlockSpec(memory_space=pltpu.MemorySpace.VMEM),) * 3,
    )(x_flat, wih, whh, b, h0p, c0p, w1, b1, w2, b2)

    out = out_flat.reshape(T, Bp, Op)[:, :B, :O]             # drop padded rows/lanes
    output = jnp.transpose(out, (1, 0, 2))                   # (B, T, O)
    # `only_last` is unused in the original forward; kept for API parity.
    # TODO(synk): for large B / long T, add a "parallel" batch-block grid axis
    # (2 TCs on v7x) and an "arbitrary" time-chunk axis with h/c carried in
    # scratch; keep everything resident at these toy shapes.
    return output, (hT[:B][None], cT[:B][None])              # hidden: (1, B, H)


def _reference_forward(value, noise, params):
    """Pure-JAX reference mirroring PyTorch semantics (for verification)."""
    x = jnp.concatenate([value, noise], axis=2)
    B, T, _ = x.shape
    H = params["w_hh"].shape[1]
    h = jnp.broadcast_to(params["h_0"][0], (B, H))
    c = jnp.broadcast_to(params["c_0"][0], (B, H))
    outs = []
    for t in range(T):
        g = (x[:, t] @ params["w_ih"].T + params["b_ih"]
             + h @ params["w_hh"].T + params["b_hh"])
        i_g = jax.nn.sigmoid(g[:, :H])
        f_g = jax.nn.sigmoid(g[:, H:2 * H])
        g_g = jnp.tanh(g[:, 2 * H:3 * H])
        o_g = jax.nn.sigmoid(g[:, 3 * H:])
        c = f_g * c + i_g * g_g
        h = o_g * jnp.tanh(c)
        z = h @ params["w1"].T + params["b1"]
        z = jnp.where(z > 0, z, 0.01 * z)
        outs.append(z @ params["w2"].T + params["b2"])
    return jnp.stack(outs, axis=1), (h[None], c[None])


if __name__ == "__main__":
    # Small shapes: batch=2, seq=8, value features=2, noise features=2,
    # hidden_dim=32, mlp hidden=100, out_feature=2, n_layers=1.
    B, T = 2, 8
    F_VAL, F_NOISE = 2, 2
    DIN = F_VAL + F_NOISE
    H = 32
    MLP_H = 100
    OUT = 2

    key = jax.random.PRNGKey(0)
    keys = jax.random.split(key, 12)
    s = 1.0 / jnp.sqrt(H)
    params = {
        "h_0":  jax.random.normal(keys[0], (1, 1, H), jnp.float32),
        "c_0":  jax.random.normal(keys[1], (1, 1, H), jnp.float32),
        "w_ih": jax.random.uniform(keys[2], (4 * H, DIN), jnp.float32, -s, s),
        "w_hh": jax.random.uniform(keys[3], (4 * H, H),  jnp.float32, -s, s),
        "b_ih": jax.random.uniform(keys[4], (4 * H,),    jnp.float32, -s, s),
        "b_hh": jax.random.uniform(keys[5], (4 * H,),    jnp.float32, -s, s),
        "w1":   jax.random.uniform(keys[6], (MLP_H, H),  jnp.float32, -s, s),
        "b1":   jax.random.uniform(keys[7], (MLP_H,),    jnp.float32, -s, s),
        "w2":   jax.random.uniform(keys[8], (OUT, MLP_H), jnp.float32, -0.1, 0.1),
        "b2":   jax.random.uniform(keys[9], (OUT,),      jnp.float32, -0.1, 0.1),
    }

    value = jax.random.normal(keys[10], (B, T, F_VAL), jnp.float32)
    noise = jax.random.normal(keys[11], (B, T, F_NOISE), jnp.float32)

    out, (h_n, c_n) = cond_lstm_forward(value, noise, params)
    jax.block_until_ready((out, h_n, c_n))

    ref_out, (ref_h, ref_c) = _reference_forward(value, noise, params)
    assert out.shape == (B, T, OUT) and h_n.shape == (1, B, H) and c_n.shape == (1, B, H)
    assert jnp.max(jnp.abs(out - ref_out)) < 1e-4
    assert jnp.max(jnp.abs(h_n - ref_h)) < 1e-4
    assert jnp.max(jnp.abs(c_n - ref_c)) < 1e-4

    # TODO(synk): n_layers > 1 (stacked LSTM) not implemented; module default is 1.
    print("KERNEL_OK")
</pallas_src>

<mosaic_0001>
module attributes {stable_mosaic.version = 11 : i64} {
  func.func @_cond_lstm_kernel(%arg0: memref<64x4xf32, #tpu.memory_space<vmem>>, %arg1: memref<4x128xf32, #tpu.memory_space<vmem>>, %arg2: memref<32x128xf32, #tpu.memory_space<vmem>>, %arg3: memref<1x128xf32, #tpu.memory_space<vmem>>, %arg4: memref<8x32xf32, #tpu.memory_space<vmem>>, %arg5: memref<8x32xf32, #tpu.memory_space<vmem>>, %arg6: memref<32x128xf32, #tpu.memory_space<vmem>>, %arg7: memref<1x128xf32, #tpu.memory_space<vmem>>, %arg8: memref<128x128xf32, #tpu.memory_space<vmem>>, %arg9: memref<1x128xf32, #tpu.memory_space<vmem>>, %arg10: memref<64x128xf32, #tpu.memory_space<vmem>>, %arg11: memref<8x32xf32, #tpu.memory_space<vmem>>, %arg12: memref<8x32xf32, #tpu.memory_space<vmem>>) attributes {dimension_semantics = [], scalar_prefetch = 0 : i64, scratch_operands = 0 : i64, tpu.core_type = #tpu.core_type<tc>} {
    %c0 = arith.constant 0 : index
    %c0_0 = arith.constant 0 : index
    %0 = vector.load %arg0[%c0, %c0_0] : memref<64x4xf32, #tpu.memory_space<vmem>>, vector<64x4xf32>
    %c0_1 = arith.constant 0 : index
    %c0_2 = arith.constant 0 : index
    %1 = vector.load %arg1[%c0_1, %c0_2] : memref<4x128xf32, #tpu.memory_space<vmem>>, vector<4x128xf32>
    %cst = arith.constant dense<0.000000e+00> : vector<64x128xf32>
    %2 = tpu.matmul %0, %1, %cst {dimension_numbers = #tpu.dot_dimension_numbers<[1], [0], [0], [1], [0, 0, 1, 1], [], []>} : vector<64x4xf32>, vector<4x128xf32>, vector<64x128xf32> -> vector<64x128xf32>
    %c0_3 = arith.constant 0 : index
    %c0_4 = arith.constant 0 : index
    %3 = vector.load %arg3[%c0_3, %c0_4] : memref<1x128xf32, #tpu.memory_space<vmem>>, vector<1x128xf32>
    %4 = vector.broadcast %3 : vector<1x128xf32> to vector<64x128xf32>
    %5 = arith.addf %2, %4 : vector<64x128xf32>
    %c0_5 = arith.constant 0 : index
    %c0_6 = arith.constant 0 : index
    %6 = vector.load %arg2[%c0_5, %c0_6] : memref<32x128xf32, #tpu.memory_space<vmem>>, vector<32x128xf32>
    %c0_7 = arith.constant 0 : index
    %c0_8 = arith.constant 0 : index
    %7 = vector.load %arg4[%c0_7, %c0_8] : memref<8x32xf32, #tpu.memory_space<vmem>>, vector<8x32xf32>
    %c0_9 = arith.constant 0 : index
    %c0_10 = arith.constant 0 : index
    %8 = vector.load %arg5[%c0_9, %c0_10] : memref<8x32xf32, #tpu.memory_space<vmem>>, vector<8x32xf32>
    %9 = vector.extract_strided_slice %5 {offsets = [0, 0], sizes = [8, 128], strides = [1, 1]} : vector<64x128xf32> to vector<8x128xf32>
    %cst_11 = arith.constant dense<0.000000e+00> : vector<8x128xf32>
    %10 = tpu.matmul %7, %6, %cst_11 {dimension_numbers = #tpu.dot_dimension_numbers<[1], [0], [0], [1], [0, 0, 1, 1], [], []>} : vector<8x32xf32>, vector<32x128xf32>, vector<8x128xf32> -> vector<8x128xf32>
    %11 = arith.addf %9, %10 : vector<8x128xf32>
    %12 = vector.extract_strided_slice %11 {offsets = [0, 0], sizes = [8, 96], strides = [1, 1]} : vector<8x128xf32> to vector<8x96xf32>
    %13 = arith.negf %12 : vector<8x96xf32>
    %14 = math.exp %13 : vector<8x96xf32>
    %cst_12 = arith.constant 1.000000e+00 : f32
    %15 = vector.broadcast %cst_12 : f32 to vector<8x96xf32>
    %16 = arith.addf %15, %14 : vector<8x96xf32>
    %17 = arith.divf %15, %16 : vector<8x96xf32>
    %18 = vector.extract_strided_slice %17 {offsets = [0, 0], sizes = [8, 32], strides = [1, 1]} : vector<8x96xf32> to vector<8x32xf32>
    %19 = vector.extract_strided_slice %17 {offsets = [0, 32], sizes = [8, 32], strides = [1, 1]} : vector<8x96xf32> to vector<8x32xf32>
    %20 = vector.extract_strided_slice %17 {offsets = [0, 64], sizes = [8, 32], strides = [1, 1]} : vector<8x96xf32> to vector<8x32xf32>
    %21 = vector.extract_strided_slice %11 {offsets = [0, 96], sizes = [8, 32], strides = [1, 1]} : vector<8x128xf32> to vector<8x32xf32>
    %22 = math.tanh %21 : vector<8x32xf32>
    %23 = arith.mulf %19, %8 : vector<8x32xf32>
    %24 = arith.mulf %18, %22 : vector<8x32xf32>
    %25 = arith.addf %23, %24 : vector<8x32xf32>
    %26 = math.tanh %25 : vector<8x32xf32>
    %27 = arith.mulf %20, %26 : vector<8x32xf32>
    %28 = vector.extract_strided_slice %5 {offsets = [8, 0], sizes = [8, 128], strides = [1, 1]} : vector<64x128xf32> to vector<8x128xf32>
    %cst_13 = arith.constant dense<0.000000e+00> : vector<8x128xf32>
    %29 = tpu.matmul %27, %6, %cst_13 {dimension_numbers = #tpu.dot_dimension_numbers<[1], [0], [0], [1], [0, 0, 1, 1], [], []>} : vector<8x32xf32>, vector<32x128xf32>, vector<8x128xf32> -> vector<8x128xf32>
    %30 = arith.addf %28, %29 : vector<8x128xf32>
    %31 = vector.extract_strided_slice %30 {offsets = [0, 0], sizes = [8, 96], strides = [1, 1]} : vector<8x128xf32> to vector<8x96xf32>
    %32 = arith.negf %31 : vector<8x96xf32>
    %33 = math.exp %32 : vector<8x96xf32>
    %cst_14 = arith.constant 1.000000e+00 : f32
    %34 = vector.broadcast %cst_14 : f32 to vector<8x96xf32>
    %35 = arith.addf %34, %33 : vector<8x96xf32>
    %36 = arith.divf %34, %35 : vector<8x96xf32>
    %37 = vector.extract_strided_slice %36 {offsets = [0, 0], sizes = [8, 32], strides = [1, 1]} : vector<8x96xf32> to vector<8x32xf32>
    %38 = vector.extract_strided_slice %36 {offsets = [0, 32], sizes = [8, 32], strides = [1, 1]} : vector<8x96xf32> to vector<8x32xf32>
    %39 = vector.extract_strided_slice %36 {offsets = [0, 64], sizes = [8, 32], strides = [1, 1]} : vector<8x96xf32> to vector<8x32xf32>
    %40 = vector.extract_strided_slice %30 {offsets = [0, 96], sizes = [8, 32], strides = [1, 1]} : vector<8x128xf32> to vector<8x32xf32>
    %41 = math.tanh %40 : vector<8x32xf32>
    %42 = arith.mulf %38, %25 : vector<8x32xf32>
    %43 = arith.mulf %37, %41 : vector<8x32xf32>
    %44 = arith.addf %42, %43 : vector<8x32xf32>
    %45 = math.tanh %44 : vector<8x32xf32>
    %46 = arith.mulf %39, %45 : vector<8x32xf32>
    %47 = vector.extract_strided_slice %5 {offsets = [16, 0], sizes = [8, 128], strides = [1, 1]} : vector<64x128xf32> to vector<8x128xf32>
    %cst_15 = arith.constant dense<0.000000e+00> : vector<8x128xf32>
    %48 = tpu.matmul %46, %6, %cst_15 {dimension_numbers = #tpu.dot_dimension_numbers<[1], [0], [0], [1], [0, 0, 1, 1], [], []>} : vector<8x32xf32>, vector<32x128xf32>, vector<8x128xf32> -> vector<8x128xf32>
    %49 = arith.addf %47, %48 : vector<8x128xf32>
    %50 = vector.extract_strided_slice %49 {offsets = [0, 0], sizes = [8, 96], strides = [1, 1]} : vector<8x128xf32> to vector<8x96xf32>
    %51 = arith.negf %50 : vector<8x96xf32>
    %52 = math.exp %51 : vector<8x96xf32>
    %cst_16 = arith.constant 1.000000e+00 : f32
    %53 = vector.broadcast %cst_16 : f32 to vector<8x96xf32>
    %54 = arith.addf %53, %52 : vector<8x96xf32>
    %55 = arith.divf %53, %54 : vector<8x96xf32>
    %56 = vector.extract_strided_slice %55 {offsets = [0, 0], sizes = [8, 32], strides = [1, 1]} : vector<8x96xf32> to vector<8x32xf32>
    %57 = vector.extract_strided_slice %55 {offsets = [0, 32], sizes = [8, 32], strides = [1, 1]} : vector<8x96xf32> to vector<8x32xf32>
    %58 = vector.extract_strided_slice %55 {offsets = [0, 64], sizes = [8, 32], strides = [1, 1]} : vector<8x96xf32> to vector<8x32xf32>
    %59 = vector.extract_strided_slice %49 {offsets = [0, 96], sizes = [8, 32], strides = [1, 1]} : vector<8x128xf32> to vector<8x32xf32>
    %60 = math.tanh %59 : vector<8x32xf32>
    %61 = arith.mulf %57, %44 : vector<8x32xf32>
    %62 = arith.mulf %56, %60 : vector<8x32xf32>
    %63 = arith.addf %61, %62 : vector<8x32xf32>
    %64 = math.tanh %63 : vector<8x32xf32>
    %65 = arith.mulf %58, %64 : vector<8x32xf32>
    %66 = vector.extract_strided_slice %5 {offsets = [24, 0], sizes = [8, 128], strides = [1, 1]} : vector<64x128xf32> to vector<8x128xf32>
    %cst_17 = arith.constant dense<0.000000e+00> : vector<8x128xf32>
    %67 = tpu.matmul %65, %6, %cst_17 {dimension_numbers = #tpu.dot_dimension_numbers<[1], [0], [0], [1], [0, 0, 1, 1], [], []>} : vector<8x32xf32>, vector<32x128xf32>, vector<8x128xf32> -> vector<8x128xf32>
    %68 = arith.addf %66, %67 : vector<8x128xf32>
    %69 = vector.extract_strided_slice %68 {offsets = [0, 0], sizes = [8, 96], strides = [1, 1]} : vector<8x128xf32> to vector<8x96xf32>
    %70 = arith.negf %69 : vector<8x96xf32>
    %71 = math.exp %70 : vector<8x96xf32>
    %cst_18 = arith.constant 1.000000e+00 : f32
    %72 = vector.broadcast %cst_18 : f32 to vector<8x96xf32>
    %73 = arith.addf %72, %71 : vector<8x96xf32>
    %74 = arith.divf %72, %73 : vector<8x96xf32>
    %75 = vector.extract_strided_slice %74 {offsets = [0, 0], sizes = [8, 32], strides = [1, 1]} : vector<8x96xf32> to vector<8x32xf32>
    %76 = vector.extract_strided_slice %74 {offsets = [0, 32], sizes = [8, 32], strides = [1, 1]} : vector<8x96xf32> to vector<8x32xf32>
    %77 = vector.extract_strided_slice %74 {offsets = [0, 64], sizes = [8, 32], strides = [1, 1]} : vector<8x96xf32> to vector<8x32xf32>
    %78 = vector.extract_strided_slice %68 {offsets = [0, 96], sizes = [8, 32], strides = [1, 1]} : vector<8x128xf32> to vector<8x32xf32>
    %79 = math.tanh %78 : vector<8x32xf32>
    %80 = arith.mulf %76, %63 : vector<8x32xf32>
    %81 = arith.mulf %75, %79 : vector<8x32xf32>
    %82 = arith.addf %80, %81 : vector<8x32xf32>
    %83 = math.tanh %82 : vector<8x32xf32>
    %84 = arith.mulf %77, %83 : vector<8x32xf32>
    %85 = vector.extract_strided_slice %5 {offsets = [32, 0], sizes = [8, 128], strides = [1, 1]} : vector<64x128xf32> to vector<8x128xf32>
    %cst_19 = arith.constant dense<0.000000e+00> : vector<8x128xf32>
    %86 = tpu.matmul %84, %6, %cst_19 {dimension_numbers = #tpu.dot_dimension_numbers<[1], [0], [0], [1], [0, 0, 1, 1], [], []>} : vector<8x32xf32>, vector<32x128xf32>, vector<8x128xf32> -> vector<8x128xf32>
    %87 = arith.addf %85, %86 : vector<8x128xf32>
    %88 = vector.extract_strided_slice %87 {offsets = [0, 0], sizes = [8, 96], strides = [1, 1]} : vector<8x128xf32> to vector<8x96xf32>
    %89 = arith.negf %88 : vector<8x96xf32>
    %90 = math.exp %89 : vector<8x96xf32>
    %cst_20 = arith.constant 1.000000e+00 : f32
    %91 = vector.broadcast %cst_20 : f32 to vector<8x96xf32>
    %92 = arith.addf %91, %90 : vector<8x96xf32>
    %93 = arith.divf %91, %92 : vector<8x96xf32>
    %94 = vector.extract_strided_slice %93 {offsets = [0, 0], sizes = [8, 32], strides = [1, 1]} : vector<8x96xf32> to vector<8x32xf32>
    %95 = vector.extract_strided_slice %93 {offsets = [0, 32], sizes = [8, 32], strides = [1, 1]} : vector<8x96xf32> to vector<8x32xf32>
    %96 = vector.extract_strided_slice %93 {offsets = [0, 64], sizes = [8, 32], strides = [1, 1]} : vector<8x96xf32> to vector<8x32xf32>
    %97 = vector.extract_strided_slice %87 {offsets = [0, 96], sizes = [8, 32], strides = [1, 1]} : vector<8x128xf32> to vector<8x32xf32>
    %98 = math.tanh %97 : vector<8x32xf32>
    %99 = arith.mulf %95, %82 : vector<8x32xf32>
    %100 = arith.mulf %94, %98 : vector<8x32xf32>
    %101 = arith.addf %99, %100 : vector<8x32xf32>
    %102 = math.tanh %101 : vector<8x32xf32>
    %103 = arith.mulf %96, %102 : vector<8x32xf32>
    %104 = vector.extract_strided_slice %5 {offsets = [40, 0], sizes = [8, 128], strides = [1, 1]} : vector<64x128xf32> to vector<8x128xf32>
    %cst_21 = arith.constant dense<0.000000e+00> : vector<8x128xf32>
    %105 = tpu.matmul %103, %6, %cst_21 {dimension_numbers = #tpu.dot_dimension_numbers<[1], [0], [0], [1], [0, 0, 1, 1], [], []>} : vector<8x32xf32>, vector<32x128xf32>, vector<8x128xf32> -> vector<8x128xf32>
    %106 = arith.addf %104, %105 : vector<8x128xf32>
    %107 = vector.extract_strided_slice %106 {offsets = [0, 0], sizes = [8, 96], strides = [1, 1]} : vector<8x128xf32> to vector<8x96xf32>
    %108 = arith.negf %107 : vector<8x96xf32>
    %109 = math.exp %108 : vector<8x96xf32>
    %cst_22 = arith.constant 1.000000e+00 : f32
    %110 = vector.broadcast %cst_22 : f32 to vector<8x96xf32>
    %111 = arith.addf %110, %109 : vector<8x96xf32>
    %112 = arith.divf %110, %111 : vector<8x96xf32>
    %113 = vector.extract_strided_slice %112 {offsets = [0, 0], sizes = [8, 32], strides = [1, 1]} : vector<8x96xf32> to vector<8x32xf32>
    %114 = vector.extract_strided_slice %112 {offsets = [0, 32], sizes = [8, 32], strides = [1, 1]} : vector<8x96xf32> to vector<8x32xf32>
    %115 = vector.extract_strided_slice %112 {offsets = [0, 64], sizes = [8, 32], strides = [1, 1]} : vector<8x96xf32> to vector<8x32xf32>
    %116 = vector.extract_strided_slice %106 {offsets = [0, 96], sizes = [8, 32], strides = [1, 1]} : vector<8x128xf32> to vector<8x32xf32>
    %117 = math.tanh %116 : vector<8x32xf32>
    %118 = arith.mulf %114, %101 : vector<8x32xf32>
    %119 = arith.mulf %113, %117 : vector<8x32xf32>
    %120 = arith.addf %118, %119 : vector<8x32xf32>
    %121 = math.tanh %120 : vector<8x32xf32>
    %122 = arith.mulf %115, %121 : vector<8x32xf32>
    %123 = vector.extract_strided_slice %5 {offsets = [48, 0], sizes = [8, 128], strides = [1, 1]} : vector<64x128xf32> to vector<8x128xf32>
    %cst_23 = arith.constant dense<0.000000e+00> : vector<8x128xf32>
    %124 = tpu.matmul %122, %6, %cst_23 {dimension_numbers = #tpu.dot_dimension_numbers<[1], [0], [0], [1], [0, 0, 1, 1], [], []>} : vector<8x32xf32>, vector<32x128xf32>, vector<8x128xf32> -> vector<8x128xf32>
    %125 = arith.addf %123, %124 : vector<8x128xf32>
    %126 = vector.extract_strided_slice %125 {offsets = [0, 0], sizes = [8, 96], strides = [1, 1]} : vector<8x128xf32> to vector<8x96xf32>
    %127 = arith.negf %126 : vector<8x96xf32>
    %128 = math.exp %127 : vector<8x96xf32>
    %cst_24 = arith.constant 1.000000e+00 : f32
    %129 = vector.broadcast %cst_24 : f32 to vector<8x96xf32>
    %130 = arith.addf %129, %128 : vector<8x96xf32>
    %131 = arith.divf %129, %130 : vector<8x96xf32>
    %132 = vector.extract_strided_slice %131 {offsets = [0, 0], sizes = [8, 32], strides = [1, 1]} : vector<8x96xf32> to vector<8x32xf32>
    %133 = vector.extract_strided_slice %131 {offsets = [0, 32], sizes = [8, 32], strides = [1, 1]} : vector<8x96xf32> to vector<8x32xf32>
    %134 = vector.extract_strided_slice %131 {offsets = [0, 64], sizes = [8, 32], strides = [1, 1]} : vector<8x96xf32> to vector<8x32xf32>
    %135 = vector.extract_strided_slice %125 {offsets = [0, 96], sizes = [8, 32], strides = [1, 1]} : vector<8x128xf32> to vector<8x32xf32>
    %136 = math.tanh %135 : vector<8x32xf32>
    %137 = arith.mulf %133, %120 : vector<8x32xf32>
    %138 = arith.mulf %132, %136 : vector<8x32xf32>
    %139 = arith.addf %137, %138 : vector<8x32xf32>
    %140 = math.tanh %139 : vector<8x32xf32>
    %141 = arith.mulf %134, %140 : vector<8x32xf32>
    %142 = vector.extract_strided_slice %5 {offsets = [56, 0], sizes = [8, 128], strides = [1, 1]} : vector<64x128xf32> to vector<8x128xf32>
    %cst_25 = arith.constant dense<0.000000e+00> : vector<8x128xf32>
    %143 = tpu.matmul %141, %6, %cst_25 {dimension_numbers = #tpu.dot_dimension_numbers<[1], [0], [0], [1], [0, 0, 1, 1], [], []>} : vector<8x32xf32>, vector<32x128xf32>, vector<8x128xf32> -> vector<8x128xf32>
    %144 = arith.addf %142, %143 : vector<8x128xf32>
    %145 = vector.extract_strided_slice %144 {offsets = [0, 0], sizes = [8, 96], strides = [1, 1]} : vector<8x128xf32> to vector<8x96xf32>
    %146 = arith.negf %145 : vector<8x96xf32>
    %147 = math.exp %146 : vector<8x96xf32>
    %cst_26 = arith.constant 1.000000e+00 : f32
    %148 = vector.broadcast %cst_26 : f32 to vector<8x96xf32>
    %149 = arith.addf %148, %147 : vector<8x96xf32>
    %150 = arith.divf %148, %149 : vector<8x96xf32>
    %151 = vector.extract_strided_slice %150 {offsets = [0, 0], sizes = [8, 32], strides = [1, 1]} : vector<8x96xf32> to vector<8x32xf32>
    %152 = vector.extract_strided_slice %150 {offsets = [0, 32], sizes = [8, 32], strides = [1, 1]} : vector<8x96xf32> to vector<8x32xf32>
    %153 = vector.extract_strided_slice %150 {offsets = [0, 64], sizes = [8, 32], strides = [1, 1]} : vector<8x96xf32> to vector<8x32xf32>
    %154 = vector.extract_strided_slice %144 {offsets = [0, 96], sizes = [8, 32], strides = [1, 1]} : vector<8x128xf32> to vector<8x32xf32>
    %155 = math.tanh %154 : vector<8x32xf32>
    %156 = arith.mulf %152, %139 : vector<8x32xf32>
    %157 = arith.mulf %151, %155 : vector<8x32xf32>
    %158 = arith.addf %156, %157 : vector<8x32xf32>
    %159 = math.tanh %158 : vector<8x32xf32>
    %160 = arith.mulf %153, %159 : vector<8x32xf32>
    %c0_27 = arith.constant 0 : index
    %c0_28 = arith.constant 0 : index
    %161 = vector.load %arg11[%c0_27, %c0_28] : memref<8x32xf32, #tpu.memory_space<vmem>>, vector<8x32xf32>
    tpu.vector_store %arg11[%c0_27, %c0_28], %160 {strides = array<i32>} : memref<8x32xf32, #tpu.memory_space<vmem>>, vector<8x32xf32>,
    %c0_29 = arith.constant 0 : index
    %c0_30 = arith.constant 0 : index
    %162 = vector.load %arg12[%c0_29, %c0_30] : memref<8x32xf32, #tpu.memory_space<vmem>>, vector<8x32xf32>
    tpu.vector_store %arg12[%c0_29, %c0_30], %158 {strides = array<i32>} : memref<8x32xf32, #tpu.memory_space<vmem>>, vector<8x32xf32>,
    %163 = tpu.concatenate %27, %46, %65, %84, %103, %122, %141, %160 in 0 : vector<8x32xf32>, vector<8x32xf32>, vector<8x32xf32>, vector<8x32xf32>, vector<8x32xf32>, vector<8x32xf32>, vector<8x32xf32>, vector<8x32xf32> -> vector<64x32xf32>
    %c0_31 = arith.constant 0 : index
    %c0_32 = arith.constant 0 : index
    %164 = vector.load %arg6[%c0_31, %c0_32] : memref<32x128xf32, #tpu.memory_space<vmem>>, vector<32x128xf32>
    %cst_33 = arith.constant dense<0.000000e+00> : vector<64x128xf32>
    %165 = tpu.matmul %163, %164, %cst_33 {dimension_numbers = #tpu.dot_dimension_numbers<[1], [0], [0], [1], [0, 0, 1, 1], [], []>} : vector<64x32xf32>, vector<32x128xf32>, vector<64x128xf32> -> vector<64x128xf32>
    %c0_34 = arith.constant 0 : index
    %c0_35 = arith.constant 0 : index
    %166 = vector.load %arg7[%c0_34, %c0_35] : memref<1x128xf32, #tpu.memory_space<vmem>>, vector<1x128xf32>
    %167 = vector.broadcast %166 : vector<1x128xf32> to vector<64x128xf32>
    %168 = arith.addf %165, %167 : vector<64x128xf32>
    %cst_36 = arith.constant 0.000000e+00 : f32
    %169 = vector.broadcast %cst_36 : f32 to vector<64x128xf32>
    %170 = arith.cmpf ogt, %168, %169 : vector<64x128xf32>
    %cst_37 = arith.constant 0.00999999977 : f32
    %171 = vector.broadcast %cst_37 : f32 to vector<64x128xf32>
    %172 = arith.mulf %171, %168 : vector<64x128xf32>
    %173 = arith.select %170, %168, %172 : vector<64x128xi1>, vector<64x128xf32>
    %c0_38 = arith.constant 0 : index
    %c0_39 = arith.constant 0 : index
    %174 = vector.load %arg8[%c0_38, %c0_39] : memref<128x128xf32, #tpu.memory_space<vmem>>, vector<128x128xf32>
    %cst_40 = arith.constant dense<0.000000e+00> : vector<64x128xf32>
    %175 = tpu.matmul %173, %174, %cst_40 {dimension_numbers = #tpu.dot_dimension_numbers<[1], [0], [0], [1], [0, 0, 1, 1], [], []>} : vector<64x128xf32>, vector<128x128xf32>, vector<64x128xf32> -> vector<64x128xf32>
    %c0_41 = arith.constant 0 : index
    %c0_42 = arith.constant 0 : index
    %176 = vector.load %arg9[%c0_41, %c0_42] : memref<1x128xf32, #tpu.memory_space<vmem>>, vector<1x128xf32>
    %177 = vector.broadcast %176 : vector<1x128xf32> to vector<64x128xf32>
    %178 = arith.addf %175, %177 : vector<64x128xf32>
    %c0_43 = arith.constant 0 : index
    %c0_44 = arith.constant 0 : index
    %179 = vector.load %arg10[%c0_43, %c0_44] : memref<64x128xf32, #tpu.memory_space<vmem>>, vector<64x128xf32>
    tpu.vector_store %arg10[%c0_43, %c0_44], %178 {strides = array<i32>} : memref<64x128xf32, #tpu.memory_space<vmem>>, vector<64x128xf32>,
    return
  }
}

</mosaic_0001>

<llo_original>
// kernel: tpu_custom_call.1
$region0: #{tpu_custom_call.1}
  #allocation0 [shape = 'u32[]', space=smem, size = 0x4, offset = 0x4, fixed_abs, tag = 'smem constant byte address 0x4 - core index']
  #allocation1 [shape = 'u32[144,128]{1,0:T(1,128)}', space=vmem, size = 0x12000, scoped, tag = 'internal scratch']
  %s0 = inlined_call_operand.vmem [shape: f32[64,4], index: 0, kind: input, shape index: {}]
  %s1 = inlined_call_operand.hbm [shape: f32[4,128], index: 1, kind: input, shape index: {}]
  %s2 = inlined_call_operand.vmem [shape: f32[32,128], index: 2, kind: input, shape index: {}]
  %s3 = inlined_call_operand.vmem [shape: f32[1,128], index: 3, kind: input, shape index: {}]
  %s4 = inlined_call_operand.vmem [shape: f32[8,32], index: 4, kind: input, shape index: {}]
  %s5 = inlined_call_operand.hbm [shape: f32[8,32], index: 5, kind: input, shape index: {}]
  %s6 = inlined_call_operand.vmem [shape: f32[32,128], index: 6, kind: input, shape index: {}]
  %s7 = inlined_call_operand.vmem [shape: f32[1,128], index: 7, kind: input, shape index: {}]
  %s8 = inlined_call_operand.hbm [shape: f32[128,128], index: 8, kind: input, shape index: {}]
  %s9 = inlined_call_operand.vmem [shape: f32[1,128], index: 9, kind: input, shape index: {}]
  %s10 = inlined_call_operand.hbm [shape: f32[64,128], index: 10, kind: output, shape index: {0}]
  %s11 = inlined_call_operand.hbm [shape: f32[8,32], index: 11, kind: output, shape index: {1}]
  %s12 = inlined_call_operand.hbm [shape: f32[8,32], index: 12, kind: output, shape index: {2}]
  %13 = xla_tuple %s10, %s11, %s12
  %s14 = sld [smem:[#allocation0]]
  $region78: #{tpu_custom_call.1} parent=0
    _
  %s16 = ssub.s32 1, %s14
  %s17 = scalar_select 0, %s16, %s14
  $region1: #{tpu_custom_call.1} parent=0
    #allocation2 [shape = 'u8[2048]{0}', space=vmem, size = 0x800, scoped, tag = 'input window, operand 1, single buffered']
    #allocation3 [shape = 's32[1]{0}', space=sflag, size = 0x4, scoped, tag = 'scoped memory for tpu_custom_call.1']
    #allocation4 [shape = 's32[1]{0}', space=sflag, size = 0x4, scoped, tag = 'scoped memory for tpu_custom_call.1']
    #allocation5 [shape = 'u8[4096]{0}', space=vmem, size = 0x1000, scoped, tag = 'input window, operand 5, single buffered']
    #allocation6 [shape = 's32[1]{0}', space=sflag, size = 0x4, scoped, tag = 'scoped memory for tpu_custom_call.1']
    #allocation7 [shape = 'u8[65536]{0}', space=vmem, size = 0x10000, scoped, tag = 'input window, operand 8, single buffered']
    #allocation8 [shape = 'u8[32768]{0}', space=vmem, size = 0x8000, scoped, tag = 'output window, operand 0, single buffered']
    #allocation9 [shape = 'u8[4096]{0}', space=vmem, size = 0x1000, scoped, tag = 'output window, operand 1, single buffered']
    #allocation10 [shape = 's32[1]{0}', space=sflag, size = 0x4, scoped, tag = 'scoped memory for tpu_custom_call.1']
    #allocation11 [shape = 'u8[4096]{0}', space=vmem, size = 0x1000, scoped, tag = 'output window, operand 2, single buffered']
    %18 = vsyncpa [#allocation3], 0
    %19 = vsyncpa [#allocation6], 0
    %20 = vsyncpa [#allocation4], 0
    %21 = vsyncpa [#allocation10], 0
    // Predicated region
    $region2: #{tpu_custom_call.1} parent=1 // pred_check
      _
    $region3: #{tpu_custom_call.1} parent=1 // pred_check_branch
      %23 = sbr.rel (0) target = $region5
    $region4: #{tpu_custom_call.1} parent=1 // pred_region
      _
    $region5: #{tpu_custom_call.1} parent=1 // pred_fallthru
      _
    // Predicated region
    $region6: #{tpu_custom_call.1} parent=1 // pred_check
      _
    $region7: #{tpu_custom_call.1} parent=1 // pred_check_branch
      %25 = sbr.rel (0) target = $region9
    $region8: #{tpu_custom_call.1} parent=1 // pred_region
      %s27 = ssub.s32 64, 64
      %28 = vsyncadd [#allocation3], %s27
      %s30 = sshll.u32 [#allocation2], 4
      %s31 = int_to_ptr.vmem [resolvable:$true] %s30
      %33 = dma.hbm_to_vmem [thread:$0]  %s1, 64, %s31, [#allocation3]
    $region9: #{tpu_custom_call.1} parent=1 // pred_fallthru
      _
    // Predicated region
    $region10: #{tpu_custom_call.1} parent=1 // pred_check
      _
    $region11: #{tpu_custom_call.1} parent=1 // pred_check_branch
      %35 = sbr.rel (0) target = $region13
    $region12: #{tpu_custom_call.1} parent=1 // pred_region
      _
    $region13: #{tpu_custom_call.1} parent=1 // pred_fallthru
      _
    // Predicated region
    $region14: #{tpu_custom_call.1} parent=1 // pred_check
      _
    $region15: #{tpu_custom_call.1} parent=1 // pred_check_branch
      %37 = sbr.rel (0) target = $region17
    $region16: #{tpu_custom_call.1} parent=1 // pred_region
      _
    $region17: #{tpu_custom_call.1} parent=1 // pred_fallthru
      _
    // Predicated region
    $region18: #{tpu_custom_call.1} parent=1 // pred_check
      _
    $region19: #{tpu_custom_call.1} parent=1 // pred_check_branch
      %39 = sbr.rel (0) target = $region21
    $region20: #{tpu_custom_call.1} parent=1 // pred_region
      _
    $region21: #{tpu_custom_call.1} parent=1 // pred_fallthru
      _
    // Predicated region
    $region22: #{tpu_custom_call.1} parent=1 // pred_check
      _
    $region23: #{tpu_custom_call.1} parent=1 // pred_check_branch
      %41 = sbr.rel (0) target = $region25
    $region24: #{tpu_custom_call.1} parent=1 // pred_region
      %s43 = ssub.s32 128, 128
      %44 = vsyncadd [#allocation6], %s43
      %s46 = sshll.u32 [#allocation5], 4
      %s47 = int_to_ptr.vmem [resolvable:$true] %s46
      %49 = dma.hbm_to_vmem [thread:$0]  %s5, 128, %s47, [#allocation6]
    $region25: #{tpu_custom_call.1} parent=1 // pred_fallthru
      _
    // Predicated region
    $region26: #{tpu_custom_call.1} parent=1 // pred_check
      _
    $region27: #{tpu_custom_call.1} parent=1 // pred_check_branch
      %51 = sbr.rel (0) target = $region29
    $region28: #{tpu_custom_call.1} parent=1 // pred_region
      _
    $region29: #{tpu_custom_call.1} parent=1 // pred_fallthru
      _
    // Predicated region
    $region30: #{tpu_custom_call.1} parent=1 // pred_check
      _
    $region31: #{tpu_custom_call.1} parent=1 // pred_check_branch
      %53 = sbr.rel (0) target = $region33
    $region32: #{tpu_custom_call.1} parent=1 // pred_region
      _
    $region33: #{tpu_custom_call.1} parent=1 // pred_fallthru
      _
    // Predicated region
    $region34: #{tpu_custom_call.1} parent=1 // pred_check
      _
    $region35: #{tpu_custom_call.1} parent=1 // pred_check_branch
      %55 = sbr.rel (0) target = $region37
    $region36: #{tpu_custom_call.1} parent=1 // pred_region
      %s57 = ssub.s32 2048, 2048
      %58 = vsyncadd [#allocation6], %s57
      %s59 = sshll.u32 [#allocation7], 4
      %s60 = int_to_ptr.vmem [resolvable:$true] %s59
      %65 = dma.hbm_to_vmem [thread:$0]  %s8, 2048, %s60, [#allocation6], 128, 128, 8
    $region37: #{tpu_custom_call.1} parent=1 // pred_fallthru
      _
    // Predicated region
    $region38: #{tpu_custom_call.1} parent=1 // pred_check
      _
    $region39: #{tpu_custom_call.1} parent=1 // pred_check_branch
      %67 = sbr.rel (0) target = $region41
    $region40: #{tpu_custom_call.1} parent=1 // pred_region
      _
    $region41: #{tpu_custom_call.1} parent=1 // pred_fallthru
      _
    // Predicated region
    $region42: #{tpu_custom_call.1} parent=1 // pred_check
      _
    $region43: #{tpu_custom_call.1} parent=1 // pred_check_branch
      %69 = sbr.rel (0) target = $region45
    $region44: #{tpu_custom_call.1} parent=1 // pred_region
      %70 = dma.done [#allocation3], 64
    $region45: #{tpu_custom_call.1} parent=1 // pred_fallthru
      _
    // Predicated region
    $region46: #{tpu_custom_call.1} parent=1 // pred_check
      _
    $region47: #{tpu_custom_call.1} parent=1 // pred_check_branch
      %72 = sbr.rel (0) target = $region49
    $region48: #{tpu_custom_call.1} parent=1 // pred_region
      %73 = dma.done [#allocation6], 128
    $region49: #{tpu_custom_call.1} parent=1 // pred_fallthru
      _
    // Predicated region
    $region50: #{tpu_custom_call.1} parent=1 // pred_check
      _
    $region51: #{tpu_custom_call.1} parent=1 // pred_check_branch
      %75 = sbr.rel (0) target = $region53
    $region52: #{tpu_custom_call.1} parent=1 // pred_region
      %76 = dma.done [#allocation6], 2048
    $region53: #{tpu_custom_call.1} parent=1 // pred_fallthru
      _
    %v77 = vld [vmem:[%s0] sm:$0xff]
    %v78 = vld [vmem:[%s0 + $0x8] sm:$0xff]
    %v79 = vld [vmem:[%s0 + $0x10] sm:$0xff]
    %v80 = vld [vmem:[%s0 + $0x18] sm:$0xff]
    %v81 = vld [vmem:[%s0 + $0x20] sm:$0xff]
    %v82 = vld [vmem:[%s0 + $0x28] sm:$0xff]
    %v83 = vld [vmem:[%s0 + $0x30] sm:$0xff]
    %v84 = vld [vmem:[%s0 + $0x38] sm:$0xff]
    %v85 = vld [vmem:[#allocation2] sm:$0xf]
    %v86 = vld [vmem:[%s3] sm:$0x1]
    %v88 = vlaneseq
    %v89 = vshrl.u32 %v88, 7
    %v90 = vsub.s32 0, %v89
    %v91 = vrot.slane %v86, %v90
    %vm93 = vcmask 31744
    %v95 = vsel %vm93, %v77, 0
    %v98 = vsel %vm93, %v78, 0
    %v101 = vsel %vm93, %v79, 0
    %v104 = vsel %vm93, %v80, 0
    %v107 = vsel %vm93, %v81, 0
    %v110 = vsel %vm93, %v82, 0
    %v113 = vsel %vm93, %v83, 0
    %v116 = vsel %vm93, %v84, 0
    %vm118 = vcmask 1043456
    %v120 = vsel %vm118, %v85, 0
    %122 = vmatprep.subr.mxu0 0.0
    %123 = vmatpush1.msra.mxu0 0.0
    %124 = vmatprep.subr.mxu0 0.0
    %125 = vmatpush1.msra.mxu0 0.0
    %126 = vmatprep.subr.mxu0 0.0
    %127 = vmatpush1.msra.mxu0 0.0
    %128 = vmatprep.subr.mxu0 0.0
    %129 = vmatpush1.msra.mxu0 0.0
    %130 = vmatprep.subr.mxu0 0.0
    %131 = vmatpush1.msra.mxu0 0.0
    %132 = vmatprep.subr.mxu0 0.0
    %133 = vmatpush1.msra.mxu0 0.0
    %134 = vmatprep.subr.mxu0 0.0
    %135 = vmatpush1.msra.mxu0 0.0
    %136 = vmatprep.subr.mxu0 0.0
    %137 = vmatpush1.msra.mxu0 0.0
    %138 = vmatprep.subr.mxu0 0.0
    %139 = vmatpush1.msra.mxu0 0.0
    %140 = vmatprep.subr.mxu0 0.0
    %141 = vmatpush1.msra.mxu0 0.0
    %142 = vmatprep.subr.mxu0 0.0
    %143 = vmatpush1.msra.mxu0 0.0
    %144 = vmatprep.subr.mxu0 0.0
    %145 = vmatpush1.msra.mxu0 0.0
    %146 = vmatprep.subr.mxu0 0.0
    %147 = vmatpush1.msra.mxu0 0.0
    %148 = vmatprep.subr.mxu0 0.0
    %149 = vmatpush1.msra.mxu0 0.0
    %150 = vmatprep.subr.mxu0 0.0
    %151 = vmatpush1.msra.mxu0 0.0
    %152 = vmatprep.subr.mxu0 0.0
    %153 = vmatpush1.msra.mxu0 %v120
    %154 = vmatprep.subr.mxu0 0.0
    %155 = vmatpush2.msra.mxu0 0.0
    %156 = vmatprep.subr.mxu0 0.0
    %157 = vmatpush2.msra.mxu0 0.0
    %158 = vmatprep.subr.mxu0 0.0
    %159 = vmatpush2.msra.mxu0 0.0
    %160 = vmatprep.subr.mxu0 0.0
    %161 = vmatpush2.msra.mxu0 0.0
    %162 = vmatprep.subr.mxu0 0.0
    %163 = vmatpush2.msra.mxu0 0.0
    %164 = vmatprep.subr.mxu0 0.0
    %165 = vmatpush2.msra.mxu0 0.0
    %166 = vmatprep.subr.mxu0 0.0
    %167 = vmatpush2.msra.mxu0 0.0
    %168 = vmatprep.subr.mxu0 0.0
    %169 = vmatpush2.msra.mxu0 0.0
    %170 = vmatprep.subr.mxu0 0.0
    %171 = vmatpush2.msra.mxu0 0.0
    %172 = vmatprep.subr.mxu0 0.0
    %173 = vmatpush2.msra.mxu0 0.0
    %174 = vmatprep.subr.mxu0 0.0
    %175 = vmatpush2.msra.mxu0 0.0
    %176 = vmatprep.subr.mxu0 0.0
    %177 = vmatpush2.msra.mxu0 0.0
    %178 = vmatprep.subr.mxu0 0.0
    %179 = vmatpush2.msra.mxu0 0.0
    %180 = vmatprep.subr.mxu0 0.0
    %181 = vmatpush2.msra.mxu0 0.0
    %182 = vmatprep.subr.mxu0 0.0
    %183 = vmatpush2.msra.mxu0 0.0
    %184 = vmatprep.subr.mxu0 0.0
    %185 = vmatpush2.msra.mxu0 0.0
    %186 = vmatprep.mubr.f32.mxu0 0.0
    %187 = vmatmul.mubr.f32.gmra.mxu0 %v95
    %v188 = vpop.f32.mrf.mxu0
    %v189 = vadd.f32 %v91, %v188
    %v190 = vpop.f32.mrf.mxu0
    %191 = vmatprep.mubr.f32.mxu0 0.0
    %192 = vmatmul.mubr.f32.gmra.mxu0 %v98
    %v193 = vpop.f32.mrf.mxu0
    %v194 = vadd.f32 %v91, %v193
    %v195 = vpop.f32.mrf.mxu0
    %196 = vmatprep.mubr.f32.mxu0 0.0
    %197 = vmatmul.mubr.f32.gmra.mxu0 %v101
    %v198 = vpop.f32.mrf.mxu0
    %v199 = vadd.f32 %v91, %v198
    %v200 = vpop.f32.mrf.mxu0
    %201 = vmatprep.mubr.f32.mxu0 0.0
    %202 = vmatmul.mubr.f32.gmra.mxu0 %v104
    %v203 = vpop.f32.mrf.mxu0
    %v204 = vadd.f32 %v91, %v203
    %v205 = vpop.f32.mrf.mxu0
    %206 = vmatprep.mubr.f32.mxu0 0.0
    %207 = vmatmul.mubr.f32.gmra.mxu0 %v107
    %v208 = vpop.f32.mrf.mxu0
    %v209 = vadd.f32 %v91, %v208
    %v210 = vpop.f32.mrf.mxu0
    %211 = vmatprep.mubr.f32.mxu0 0.0
    %212 = vmatmul.mubr.f32.gmra.mxu0 %v110
    %v213 = vpop.f32.mrf.mxu0
    %v214 = vadd.f32 %v91, %v213
    %v215 = vpop.f32.mrf.mxu0
    %216 = vmatprep.mubr.f32.mxu0 0.0
    %217 = vmatmul.mubr.f32.gmra.mxu0 %v113
    %v218 = vpop.f32.mrf.mxu0
    %v219 = vadd.f32 %v91, %v218
    %v220 = vpop.f32.mrf.mxu0
    %221 = vmatprep.mubr.f32.mxu0 0.0
    %222 = vmatmul.mubr.f32.gmra.mxu0 %v116
    %v223 = vpop.f32.mrf.mxu0
    %v224 = vadd.f32 %v91, %v223
    %v225 = vpop.f32.mrf.mxu0
    %226 = vdwg.mxu0
    %v227 = vld [vmem:[%s2] sm:$0xff]
    %v228 = vld [vmem:[%s2 + $0x8] sm:$0xff]
    %v229 = vld [vmem:[%s2 + $0x10] sm:$0xff]
    %v230 = vld [vmem:[%s2 + $0x18] sm:$0xff]
    %v231 = vld [vmem:[%s4] sm:$0xff]
    %v232 = vld [vmem:[#allocation5] sm:$0xff]
    %vm233 = vcmask 261120
    %v235 = vsel %vm233, %v231, 0
    %237 = vmatprep.subr.mxu0 0.0
    %238 = vmatpush1.msra.mxu0 0.0
    %239 = vmatprep.subr.mxu0 0.0
    %240 = vmatpush1.msra.mxu0 0.0
    %241 = vmatprep.subr.mxu0 0.0
    %242 = vmatpush1.msra.mxu0 0.0
    %243 = vmatprep.subr.mxu0 0.0
    %244 = vmatpush1.msra.mxu0 0.0
    %245 = vmatprep.subr.mxu0 0.0
    %246 = vmatpush1.msra.mxu0 0.0
    %247 = vmatprep.subr.mxu0 0.0
    %248 = vmatpush1.msra.mxu0 0.0
    %249 = vmatprep.subr.mxu0 0.0
    %250 = vmatpush1.msra.mxu0 0.0
    %251 = vmatprep.subr.mxu0 0.0
    %252 = vmatpush1.msra.mxu0 0.0
    %253 = vmatprep.subr.mxu0 0.0
    %254 = vmatpush1.msra.mxu0 0.0
    %255 = vmatprep.subr.mxu0 0.0
    %256 = vmatpush1.msra.mxu0 0.0
    %257 = vmatprep.subr.mxu0 0.0
    %258 = vmatpush1.msra.mxu0 0.0
    %259 = vmatprep.subr.mxu0 0.0
    %260 = vmatpush1.msra.mxu0 0.0
    %261 = vmatprep.subr.mxu0 0.0
    %262 = vmatpush1.msra.mxu0 %v230
    %263 = vmatprep.subr.mxu0 0.0
    %264 = vmatpush1.msra.mxu0 %v229
    %265 = vmatprep.subr.mxu0 0.0
    %266 = vmatpush1.msra.mxu0 %v228
    %267 = vmatprep.subr.mxu0 0.0
    %268 = vmatpush1.msra.mxu0 %v227
    %269 = vmatprep.subr.mxu0 0.0
    %270 = vmatpush2.msra.mxu0 0.0
    %271 = vmatprep.subr.mxu0 0.0
    %272 = vmatpush2.msra.mxu0 0.0
    %273 = vmatprep.subr.mxu0 0.0
    %274 = vmatpush2.msra.mxu0 0.0
    %275 = vmatprep.subr.mxu0 0.0
    %276 = vmatpush2.msra.mxu0 0.0
    %277 = vmatprep.subr.mxu0 0.0
    %278 = vmatpush2.msra.mxu0 0.0
    %279 = vmatprep.subr.mxu0 0.0
    %280 = vmatpush2.msra.mxu0 0.0
    %281 = vmatprep.subr.mxu0 0.0
    %282 = vmatpush2.msra.mxu0 0.0
    %283 = vmatprep.subr.mxu0 0.0
    %284 = vmatpush2.msra.mxu0 0.0
    %285 = vmatprep.subr.mxu0 0.0
    %286 = vmatpush2.msra.mxu0 0.0
    %287 = vmatprep.subr.mxu0 0.0
    %288 = vmatpush2.msra.mxu0 0.0
    %289 = vmatprep.subr.mxu0 0.0
    %290 = vmatpush2.msra.mxu0 0.0
    %291 = vmatprep.subr.mxu0 0.0
    %292 = vmatpush2.msra.mxu0 0.0
    %293 = vmatprep.subr.mxu0 0.0
    %294 = vmatpush2.msra.mxu0 0.0
    %295 = vmatprep.subr.mxu0 0.0
    %296 = vmatpush2.msra.mxu0 0.0
    %297 = vmatprep.subr.mxu0 0.0
    %298 = vmatpush2.msra.mxu0 0.0
    %299 = vmatprep.subr.mxu0 0.0
    %300 = vmatpush2.msra.mxu0 0.0
    %301 = vmatprep.mubr.f32.mxu0 0.0
    %302 = vmatmul.mubr.f32.gmra.mxu0 %v235
    %v303 = vpop.f32.mrf.mxu0
    %v304 = vadd.f32 0.0, %v303
    %v305 = vpop.f32.mrf.mxu0
    %306 = vdwg.mxu0
    %v307 = vadd.f32 %v189, %v304
    %v308 = vxor.u32 %v307, 2147483648
    %v309 = vmul.f32 %v308, 1.442695
    %v310 = vpow.pop %v309
    %v311 = vadd.f32 %v310, 1.0
    %v312 = vrcp.pop %v311
    %v313 = vmul.f32 1.0, %v312
    %v314 = vtanh.pop %v307
    %316 = vrot.lane.b32.xlu0 %v232, 32
    %v317 = vpop.permute.xlu0 %316
    %v319 = vmul.f32 %v313, %v317
    %321 = vrot.lane.b32.xlu0 %v314, 32
    %v322 = vpop.permute.xlu0 %321
    %v324 = vmul.f32 %v313, %v322
    %326 = vrot.lane.b32.xlu0 %v324, 32
    %v327 = vpop.permute.xlu0 %326
    %v329 = vadd.f32 %v319, %v327
    %v330 = vtanh.pop %v329
    %332 = vrot.lane.b32.xlu0 %v330, 32
    %v333 = vpop.permute.xlu0 %332
    %v335 = vmul.f32 %v313, %v333
    %337 = vrot.lane.b32.xlu0 %v335, 64
    %v338 = vpop.permute.xlu0 %337
    %v339 = vsel %vm233, %v338, 0
    %341 = vmatprep.subr.mxu0 0.0
    %342 = vmatpush1.msra.mxu0 0.0
    %343 = vmatprep.subr.mxu0 0.0
    %344 = vmatpush1.msra.mxu0 0.0
    %345 = vmatprep.subr.mxu0 0.0
    %346 = vmatpush1.msra.mxu0 0.0
    %347 = vmatprep.subr.mxu0 0.0
    %348 = vmatpush1.msra.mxu0 0.0
    %349 = vmatprep.subr.mxu0 0.0
    %350 = vmatpush1.msra.mxu0 0.0
    %351 = vmatprep.subr.mxu0 0.0
    %352 = vmatpush1.msra.mxu0 0.0
    %353 = vmatprep.subr.mxu0 0.0
    %354 = vmatpush1.msra.mxu0 0.0
    %355 = vmatprep.subr.mxu0 0.0
    %356 = vmatpush1.msra.mxu0 0.0
    %357 = vmatprep.subr.mxu0 0.0
    %358 = vmatpush1.msra.mxu0 0.0
    %359 = vmatprep.subr.mxu0 0.0
    %360 = vmatpush1.msra.mxu0 0.0
    %361 = vmatprep.subr.mxu0 0.0
    %362 = vmatpush1.msra.mxu0 0.0
    %363 = vmatprep.subr.mxu0 0.0
    %364 = vmatpush1.msra.mxu0 0.0
    %365 = vmatprep.subr.mxu0 0.0
    %366 = vmatpush1.msra.mxu0 %v230
    %367 = vmatprep.subr.mxu0 0.0
    %368 = vmatpush1.msra.mxu0 %v229
    %369 = vmatprep.subr.mxu0 0.0
    %370 = vmatpush1.msra.mxu0 %v228
    %371 = vmatprep.subr.mxu0 0.0
    %372 = vmatpush1.msra.mxu0 %v227
    %373 = vmatprep.subr.mxu0 0.0
    %374 = vmatpush2.msra.mxu0 0.0
    %375 = vmatprep.subr.mxu0 0.0
    %376 = vmatpush2.msra.mxu0 0.0
    %377 = vmatprep.subr.mxu0 0.0
    %378 = vmatpush2.msra.mxu0 0.0
    %379 = vmatprep.subr.mxu0 0.0
    %380 = vmatpush2.msra.mxu0 0.0
    %381 = vmatprep.subr.mxu0 0.0
    %382 = vmatpush2.msra.mxu0 0.0
    %383 = vmatprep.subr.mxu0 0.0
    %384 = vmatpush2.msra.mxu0 0.0
    %385 = vmatprep.subr.mxu0 0.0
    %386 = vmatpush2.msra.mxu0 0.0
    %387 = vmatprep.subr.mxu0 0.0
    %388 = vmatpush2.msra.mxu0 0.0
    %389 = vmatprep.subr.mxu0 0.0
    %390 = vmatpush2.msra.mxu0 0.0
    %391 = vmatprep.subr.mxu0 0.0
    %392 = vmatpush2.msra.mxu0 0.0
    %393 = vmatprep.subr.mxu0 0.0
    %394 = vmatpush2.msra.mxu0 0.0
    %395 = vmatprep.subr.mxu0 0.0
    %396 = vmatpush2.msra.mxu0 0.0
    %397 = vmatprep.subr.mxu0 0.0
    %398 = vmatpush2.msra.mxu0 0.0
    %399 = vmatprep.subr.mxu0 0.0
    %400 = vmatpush2.msra.mxu0 0.0
    %401 = vmatprep.subr.mxu0 0.0
    %402 = vmatpush2.msra.mxu0 0.0
    %403 = vmatprep.subr.mxu0 0.0
    %404 = vmatpush2.msra.mxu0 0.0
    %405 = vmatprep.mubr.f32.mxu0 0.0
    %406 = vmatmul.mubr.f32.gmra.mxu0 %v339
    %v407 = vpop.f32.mrf.mxu0
    %v408 = vadd.f32 0.0, %v407
    %v409 = vpop.f32.mrf.mxu0
    %410 = vdwg.mxu0
    %v411 = vadd.f32 %v194, %v408
    %v412 = vxor.u32 %v411, 2147483648
    %v413 = vmul.f32 %v412, 1.442695
    %v414 = vpow.pop %v413
    %v415 = vadd.f32 %v414, 1.0
    %v416 = vrcp.pop %v415
    %v417 = vmul.f32 1.0, %v416
    %v418 = vtanh.pop %v411
    %v419 = vmul.f32 %v417, %v329
    %421 = vrot.lane.b32.xlu0 %v418, 32
    %v422 = vpop.permute.xlu0 %421
    %v424 = vmul.f32 %v417, %v422
    %426 = vrot.lane.b32.xlu0 %v424, 32
    %v427 = vpop.permute.xlu0 %426
    %v429 = vadd.f32 %v419, %v427
    %v430 = vtanh.pop %v429
    %432 = vrot.lane.b32.xlu0 %v430, 32
    %v433 = vpop.permute.xlu0 %432
    %v435 = vmul.f32 %v417, %v433
    %437 = vrot.lane.b32.xlu0 %v435, 64
    %v438 = vpop.permute.xlu0 %437
    %v439 = vsel %vm233, %v438, 0
    %441 = vmatprep.subr.mxu0 0.0
    %442 = vmatpush1.msra.mxu0 0.0
    %443 = vmatprep.subr.mxu0 0.0
    %444 = vmatpush1.msra.mxu0 0.0
    %445 = vmatprep.subr.mxu0 0.0
    %446 = vmatpush1.msra.mxu0 0.0
    %447 = vmatprep.subr.mxu0 0.0
    %448 = vmatpush1.msra.mxu0 0.0
    %449 = vmatprep.subr.mxu0 0.0
    %450 = vmatpush1.msra.mxu0 0.0
    %451 = vmatprep.subr.mxu0 0.0
    %452 = vmatpush1.msra.mxu0 0.0
    %453 = vmatprep.subr.mxu0 0.0
    %454 = vmatpush1.msra.mxu0 0.0
    %455 = vmatprep.subr.mxu0 0.0
    %456 = vmatpush1.msra.mxu0 0.0
    %457 = vmatprep.subr.mxu0 0.0
    %458 = vmatpush1.msra.mxu0 0.0
    %459 = vmatprep.subr.mxu0 0.0
    %460 = vmatpush1.msra.mxu0 0.0
    %461 = vmatprep.subr.mxu0 0.0
    %462 = vmatpush1.msra.mxu0 0.0
    %463 = vmatprep.subr.mxu0 0.0
    %464 = vmatpush1.msra.mxu0 0.0
    %465 = vmatprep.subr.mxu0 0.0
    %466 = vmatpush1.msra.mxu0 %v230
    %467 = vmatprep.subr.mxu0 0.0
    %468 = vmatpush1.msra.mxu0 %v229
    %469 = vmatprep.subr.mxu0 0.0
    %470 = vmatpush1.msra.mxu0 %v228
    %471 = vmatprep.subr.mxu0 0.0
    %472 = vmatpush1.msra.mxu0 %v227
    %473 = vmatprep.subr.mxu0 0.0
    %474 = vmatpush2.msra.mxu0 0.0
    %475 = vmatprep.subr.mxu0 0.0
    %476 = vmatpush2.msra.mxu0 0.0
    %477 = vmatprep.subr.mxu0 0.0
    %478 = vmatpush2.msra.mxu0 0.0
    %479 = vmatprep.subr.mxu0 0.0
    %480 = vmatpush2.msra.mxu0 0.0
    %481 = vmatprep.subr.mxu0 0.0
    %482 = vmatpush2.msra.mxu0 0.0
    %483 = vmatprep.subr.mxu0 0.0
    %484 = vmatpush2.msra.mxu0 0.0
    %485 = vmatprep.subr.mxu0 0.0
    %486 = vmatpush2.msra.mxu0 0.0
    %487 = vmatprep.subr.mxu0 0.0
    %488 = vmatpush2.msra.mxu0 0.0
    %489 = vmatprep.subr.mxu0 0.0
    %490 = vmatpush2.msra.mxu0 0.0
    %491 = vmatprep.subr.mxu0 0.0
    %492 = vmatpush2.msra.mxu0 0.0
    %493 = vmatprep.subr.mxu0 0.0
    %494 = vmatpush2.msra.mxu0 0.0
    %495 = vmatprep.subr.mxu0 0.0
    %496 = vmatpush2.msra.mxu0 0.0
    %497 = vmatprep.subr.mxu0 0.0
    %498 = vmatpush2.msra.mxu0 0.0
    %499 = vmatprep.subr.mxu0 0.0
    %500 = vmatpush2.msra.mxu0 0.0
    %501 = vmatprep.subr.mxu0 0.0
    %502 = vmatpush2.msra.mxu0 0.0
    %503 = vmatprep.subr.mxu0 0.0
    %504 = vmatpush2.msra.mxu0 0.0
    %505 = vmatprep.mubr.f32.mxu0 0.0
    %506 = vmatmul.mubr.f32.gmra.mxu0 %v439
    %v507 = vpop.f32.mrf.mxu0
    %v508 = vadd.f32 0.0, %v507
    %v509 = vpop.f32.mrf.mxu0
    %510 = vdwg.mxu0
    %v511 = vadd.f32 %v199, %v508
    %v512 = vxor.u32 %v511, 2147483648
    %v513 = vmul.f32 %v512, 1.442695
    %v514 = vpow.pop %v513
    %v515 = vadd.f32 %v514, 1.0
    %v516 = vrcp.pop %v515
    %v517 = vmul.f32 1.0, %v516
    %v518 = vtanh.pop %v511
    %v519 = vmul.f32 %v517, %v429
    %521 = vrot.lane.b32.xlu0 %v518, 32
    %v522 = vpop.permute.xlu0 %521
    %v524 = vmul.f32 %v517, %v522
    %526 = vrot.lane.b32.xlu0 %v524, 32
    %v527 = vpop.permute.xlu0 %526
    %v529 = vadd.f32 %v519, %v527
    %v530 = vtanh.pop %v529
    %532 = vrot.lane.b32.xlu0 %v530, 32
    %v533 = vpop.permute.xlu0 %532
    %v535 = vmul.f32 %v517, %v533
    %537 = vrot.lane.b32.xlu0 %v535, 64
    %v538 = vpop.permute.xlu0 %537
    %v539 = vsel %vm233, %v538, 0
    %541 = vmatprep.subr.mxu0 0.0
    %542 = vmatpush1.msra.mxu0 0.0
    %543 = vmatprep.subr.mxu0 0.0
    %544 = vmatpush1.msra.mxu0 0.0
    %545 = vmatprep.subr.mxu0 0.0
    %546 = vmatpush1.msra.mxu0 0.0
    %547 = vmatprep.subr.mxu0 0.0
    %548 = vmatpush1.msra.mxu0 0.0
    %549 = vmatprep.subr.mxu0 0.0
    %550 = vmatpush1.msra.mxu0 0.0
    %551 = vmatprep.subr.mxu0 0.0
    %552 = vmatpush1.msra.mxu0 0.0
    %553 = vmatprep.subr.mxu0 0.0
    %554 = vmatpush1.msra.mxu0 0.0
    %555 = vmatprep.subr.mxu0 0.0
    %556 = vmatpush1.msra.mxu0 0.0
    %557 = vmatprep.subr.mxu0 0.0
    %558 = vmatpush1.msra.mxu0 0.0
    %559 = vmatprep.subr.mxu0 0.0
    %560 = vmatpush1.msra.mxu0 0.0
    %561 = vmatprep.subr.mxu0 0.0
    %562 = vmatpush1.msra.mxu0 0.0
    %563 = vmatprep.subr.mxu0 0.0
    %564 = vmatpush1.msra.mxu0 0.0
    %565 = vmatprep.subr.mxu0 0.0
    %566 = vmatpush1.msra.mxu0 %v230
    %567 = vmatprep.subr.mxu0 0.0
    %568 = vmatpush1.msra.mxu0 %v229
    %569 = vmatprep.subr.mxu0 0.0
    %570 = vmatpush1.msra.mxu0 %v228
    %571 = vmatprep.subr.mxu0 0.0
    %572 = vmatpush1.msra.mxu0 %v227
    %573 = vmatprep.subr.mxu0 0.0
    %574 = vmatpush2.msra.mxu0 0.0
    %575 = vmatprep.subr.mxu0 0.0
    %576 = vmatpush2.msra.mxu0 0.0
    %577 = vmatprep.subr.mxu0 0.0
    %578 = vmatpush2.msra.mxu0 0.0
    %579 = vmatprep.subr.mxu0 0.0
    %580 = vmatpush2.msra.mxu0 0.0
    %581 = vmatprep.subr.mxu0 0.0
    %582 = vmatpush2.msra.mxu0 0.0
    %583 = vmatprep.subr.mxu0 0.0
    %584 = vmatpush2.msra.mxu0 0.0
    %585 = vmatprep.subr.mxu0 0.0
    %586 = vmatpush2.msra.mxu0 0.0
    %587 = vmatprep.subr.mxu0 0.0
    %588 = vmatpush2.msra.mxu0 0.0
    %589 = vmatprep.subr.mxu0 0.0
    %590 = vmatpush2.msra.mxu0 0.0
    %591 = vmatprep.subr.mxu0 0.0
    %592 = vmatpush2.msra.mxu0 0.0
    %593 = vmatprep.subr.mxu0 0.0
    %594 = vmatpush2.msra.mxu0 0.0
    %595 = vmatprep.subr.mxu0 0.0
    %596 = vmatpush2.msra.mxu0 0.0
    %597 = vmatprep.subr.mxu0 0.0
    %598 = vmatpush2.msra.mxu0 0.0
    %599 = vmatprep.subr.mxu0 0.0
    %600 = vmatpush2.msra.mxu0 0.0
    %601 = vmatprep.subr.mxu0 0.0
    %602 = vmatpush2.msra.mxu0 0.0
    %603 = vmatprep.subr.mxu0 0.0
    %604 = vmatpush2.msra.mxu0 0.0
    %605 = vmatprep.mubr.f32.mxu0 0.0
    %606 = vmatmul.mubr.f32.gmra.mxu0 %v539
    %v607 = vpop.f32.mrf.mxu0
    %v608 = vadd.f32 0.0, %v607
    %v609 = vpop.f32.mrf.mxu0
    %610 = vdwg.mxu0
    %v611 = vadd.f32 %v204, %v608
    %v612 = vxor.u32 %v611, 2147483648
    %v613 = vmul.f32 %v612, 1.442695
    %v614 = vpow.pop %v613
    %v615 = vadd.f32 %v614, 1.0
    %v616 = vrcp.pop %v615
    %v617 = vmul.f32 1.0, %v616
    %v618 = vtanh.pop %v611
    %v619 = vmul.f32 %v617, %v529
    %621 = vrot.lane.b32.xlu0 %v618, 32
    %v622 = vpop.permute.xlu0 %621
    %v624 = vmul.f32 %v617, %v622
    %626 = vrot.lane.b32.xlu0 %v624, 32
    %v627 = vpop.permute.xlu0 %626
    %v629 = vadd.f32 %v619, %v627
    %v630 = vtanh.pop %v629
    %632 = vrot.lane.b32.xlu0 %v630, 32
    %v633 = vpop.permute.xlu0 %632
    %v635 = vmul.f32 %v617, %v633
    %637 = vrot.lane.b32.xlu0 %v635, 64
    %v638 = vpop.permute.xlu0 %637
    %v639 = vsel %vm233, %v638, 0
    %641 = vmatprep.subr.mxu0 0.0
    %642 = vmatpush1.msra.mxu0 0.0
    %643 = vmatprep.subr.mxu0 0.0
    %644 = vmatpush1.msra.mxu0 0.0
    %645 = vmatprep.subr.mxu0 0.0
    %646 = vmatpush1.msra.mxu0 0.0
    %647 = vmatprep.subr.mxu0 0.0
    %648 = vmatpush1.msra.mxu0 0.0
    %649 = vmatprep.subr.mxu0 0.0
    %650 = vmatpush1.msra.mxu0 0.0
    %651 = vmatprep.subr.mxu0 0.0
    %652 = vmatpush1.msra.mxu0 0.0
    %653 = vmatprep.subr.mxu0 0.0
    %654 = vmatpush1.msra.mxu0 0.0
    %655 = vmatprep.subr.mxu0 0.0
    %656 = vmatpush1.msra.mxu0 0.0
    %657 = vmatprep.subr.mxu0 0.0
    %658 = vmatpush1.msra.mxu0 0.0
    %659 = vmatprep.subr.mxu0 0.0
    %660 = vmatpush1.msra.mxu0 0.0
    %661 = vmatprep.subr.mxu0 0.0
    %662 = vmatpush1.msra.mxu0 0.0
    %663 = vmatprep.subr.mxu0 0.0
    %664 = vmatpush1.msra.mxu0 0.0
    %665 = vmatprep.subr.mxu0 0.0
    %666 = vmatpush1.msra.mxu0 %v230
    %667 = vmatprep.subr.mxu0 0.0
    %668 = vmatpush1.msra.mxu0 %v229
    %669 = vmatprep.subr.mxu0 0.0
    %670 = vmatpush1.msra.mxu0 %v228
    %671 = vmatprep.subr.mxu0 0.0
    %672 = vmatpush1.msra.mxu0 %v227
    %673 = vmatprep.subr.mxu0 0.0
    %674 = vmatpush2.msra.mxu0 0.0
    %675 = vmatprep.subr.mxu0 0.0
    %676 = vmatpush2.msra.mxu0 0.0
    %677 = vmatprep.subr.mxu0 0.0
    %678 = vmatpush2.msra.mxu0 0.0
    %679 = vmatprep.subr.mxu0 0.0
    %680 = vmatpush2.msra.mxu0 0.0
    %681 = vmatprep.subr.mxu0 0.0
    %682 = vmatpush2.msra.mxu0 0.0
    %683 = vmatprep.subr.mxu0 0.0
    %684 = vmatpush2.msra.mxu0 0.0
    %685 = vmatprep.subr.mxu0 0.0
    %686 = vmatpush2.msra.mxu0 0.0
    %687 = vmatprep.subr.mxu0 0.0
    %688 = vmatpush2.msra.mxu0 0.0
    %689 = vmatprep.subr.mxu0 0.0
    %690 = vmatpush2.msra.mxu0 0.0
    %691 = vmatprep.subr.mxu0 0.0
    %692 = vmatpush2.msra.mxu0 0.0
    %693 = vmatprep.subr.mxu0 0.0
    %694 = vmatpush2.msra.mxu0 0.0
    %695 = vmatprep.subr.mxu0 0.0
    %696 = vmatpush2.msra.mxu0 0.0
    %697 = vmatprep.subr.mxu0 0.0
    %698 = vmatpush2.msra.mxu0 0.0
    %699 = vmatprep.subr.mxu0 0.0
    %700 = vmatpush2.msra.mxu0 0.0
    %701 = vmatprep.subr.mxu0 0.0
    %702 = vmatpush2.msra.mxu0 0.0
    %703 = vmatprep.subr.mxu0 0.0
    %704 = vmatpush2.msra.mxu0 0.0
    %705 = vmatprep.mubr.f32.mxu0 0.0
    %706 = vmatmul.mubr.f32.gmra.mxu0 %v639
    %v707 = vpop.f32.mrf.mxu0
    %v708 = vadd.f32 0.0, %v707
    %v709 = vpop.f32.mrf.mxu0
    %710 = vdwg.mxu0
    %v711 = vadd.f32 %v209, %v708
    %v712 = vxor.u32 %v711, 2147483648
    %v713 = vmul.f32 %v712, 1.442695
    %v714 = vpow.pop %v713
    %v715 = vadd.f32 %v714, 1.0
    %v716 = vrcp.pop %v715
    %v717 = vmul.f32 1.0, %v716
    %v718 = vtanh.pop %v711
    %v719 = vmul.f32 %v717, %v629
    %721 = vrot.lane.b32.xlu0 %v718, 32
    %v722 = vpop.permute.xlu0 %721
    %v724 = vmul.f32 %v717, %v722
    %726 = vrot.lane.b32.xlu0 %v724, 32
    %v727 = vpop.permute.xlu0 %726
    %v729 = vadd.f32 %v719, %v727
    %v730 = vtanh.pop %v729
    %732 = vrot.lane.b32.xlu0 %v730, 32
    %v733 = vpop.permute.xlu0 %732
    %v735 = vmul.f32 %v717, %v733
    %737 = vrot.lane.b32.xlu0 %v735, 64
    %v738 = vpop.permute.xlu0 %737
    %v739 = vsel %vm233, %v738, 0
    %741 = vmatprep.subr.mxu0 0.0
    %742 = vmatpush1.msra.mxu0 0.0
    %743 = vmatprep.subr.mxu0 0.0
    %744 = vmatpush1.msra.mxu0 0.0
    %745 = vmatprep.subr.mxu0 0.0
    %746 = vmatpush1.msra.mxu0 0.0
    %747 = vmatprep.subr.mxu0 0.0
    %748 = vmatpush1.msra.mxu0 0.0
    %749 = vmatprep.subr.mxu0 0.0
    %750 = vmatpush1.msra.mxu0 0.0
    %751 = vmatprep.subr.mxu0 0.0
    %752 = vmatpush1.msra.mxu0 0.0
    %753 = vmatprep.subr.mxu0 0.0
    %754 = vmatpush1.msra.mxu0 0.0
    %755 = vmatprep.subr.mxu0 0.0
    %756 = vmatpush1.msra.mxu0 0.0
    %757 = vmatprep.subr.mxu0 0.0
    %758 = vmatpush1.msra.mxu0 0.0
    %759 = vmatprep.subr.mxu0 0.0
    %760 = vmatpush1.msra.mxu0 0.0
    %761 = vmatprep.subr.mxu0 0.0
    %762 = vmatpush1.msra.mxu0 0.0
    %763 = vmatprep.subr.mxu0 0.0
    %764 = vmatpush1.msra.mxu0 0.0
    %765 = vmatprep.subr.mxu0 0.0
    %766 = vmatpush1.msra.mxu0 %v230
    %767 = vmatprep.subr.mxu0 0.0
    %768 = vmatpush1.msra.mxu0 %v229
    %769 = vmatprep.subr.mxu0 0.0
    %770 = vmatpush1.msra.mxu0 %v228
    %771 = vmatprep.subr.mxu0 0.0
    %772 = vmatpush1.msra.mxu0 %v227
    %773 = vmatprep.subr.mxu0 0.0
    %774 = vmatpush2.msra.mxu0 0.0
    %775 = vmatprep.subr.mxu0 0.0
    %776 = vmatpush2.msra.mxu0 0.0
    %777 = vmatprep.subr.mxu0 0.0
    %778 = vmatpush2.msra.mxu0 0.0
    %779 = vmatprep.subr.mxu0 0.0
    %780 = vmatpush2.msra.mxu0 0.0
    %781 = vmatprep.subr.mxu0 0.0
    %782 = vmatpush2.msra.mxu0 0.0
    %783 = vmatprep.subr.mxu0 0.0
    %784 = vmatpush2.msra.mxu0 0.0
    %785 = vmatprep.subr.mxu0 0.0
    %786 = vmatpush2.msra.mxu0 0.0
    %787 = vmatprep.subr.mxu0 0.0
    %788 = vmatpush2.msra.mxu0 0.0
    %789 = vmatprep.subr.mxu0 0.0
    %790 = vmatpush2.msra.mxu0 0.0
    %791 = vmatprep.subr.mxu0 0.0
    %792 = vmatpush2.msra.mxu0 0.0
    %793 = vmatprep.subr.mxu0 0.0
    %794 = vmatpush2.msra.mxu0 0.0
    %795 = vmatprep.subr.mxu0 0.0
    %796 = vmatpush2.msra.mxu0 0.0
    %797 = vmatprep.subr.mxu0 0.0
    %798 = vmatpush2.msra.mxu0 0.0
    %799 = vmatprep.subr.mxu0 0.0
    %800 = vmatpush2.msra.mxu0 0.0
    %801 = vmatprep.subr.mxu0 0.0
    %802 = vmatpush2.msra.mxu0 0.0
    %803 = vmatprep.subr.mxu0 0.0
    %804 = vmatpush2.msra.mxu0 0.0
    %805 = vmatprep.mubr.f32.mxu0 0.0
    %806 = vmatmul.mubr.f32.gmra.mxu0 %v739
    %v807 = vpop.f32.mrf.mxu0
    %v808 = vadd.f32 0.0, %v807
    %v809 = vpop.f32.mrf.mxu0
    %810 = vdwg.mxu0
    %v811 = vadd.f32 %v214, %v808
    %v812 = vxor.u32 %v811, 2147483648
    %v813 = vmul.f32 %v812, 1.442695
    %v814 = vpow.pop %v813
    %v815 = vadd.f32 %v814, 1.0
    %v816 = vrcp.pop %v815
    %v817 = vmul.f32 1.0, %v816
    %v818 = vtanh.pop %v811
    %v819 = vmul.f32 %v817, %v729
    %821 = vrot.lane.b32.xlu0 %v818, 32
    %v822 = vpop.permute.xlu0 %821
    %v824 = vmul.f32 %v817, %v822
    %826 = vrot.lane.b32.xlu0 %v824, 32
    %v827 = vpop.permute.xlu0 %826
    %v829 = vadd.f32 %v819, %v827
    %v830 = vtanh.pop %v829
    %832 = vrot.lane.b32.xlu0 %v830, 32
    %v833 = vpop.permute.xlu0 %832
    %v835 = vmul.f32 %v817, %v833
    %837 = vrot.lane.b32.xlu0 %v835, 64
    %v838 = vpop.permute.xlu0 %837
    %v839 = vsel %vm233, %v838, 0
    %841 = vmatprep.subr.mxu0 0.0
    %842 = vmatpush1.msra.mxu0 0.0
    %843 = vmatprep.subr.mxu0 0.0
    %844 = vmatpush1.msra.mxu0 0.0
    %845 = vmatprep.subr.mxu0 0.0
    %846 = vmatpush1.msra.mxu0 0.0
    %847 = vmatprep.subr.mxu0 0.0
    %848 = vmatpush1.msra.mxu0 0.0
    %849 = vmatprep.subr.mxu0 0.0
    %850 = vmatpush1.msra.mxu0 0.0
    %851 = vmatprep.subr.mxu0 0.0
    %852 = vmatpush1.msra.mxu0 0.0
    %853 = vmatprep.subr.mxu0 0.0
    %854 = vmatpush1.msra.mxu0 0.0
    %855 = vmatprep.subr.mxu0 0.0
    %856 = vmatpush1.msra.mxu0 0.0
    %857 = vmatprep.subr.mxu0 0.0
    %858 = vmatpush1.msra.mxu0 0.0
    %859 = vmatprep.subr.mxu0 0.0
    %860 = vmatpush1.msra.mxu0 0.0
    %861 = vmatprep.subr.mxu0 0.0
    %862 = vmatpush1.msra.mxu0 0.0
    %863 = vmatprep.subr.mxu0 0.0
    %864 = vmatpush1.msra.mxu0 0.0
    %865 = vmatprep.subr.mxu0 0.0
    %866 = vmatpush1.msra.mxu0 %v230
    %867 = vmatprep.subr.mxu0 0.0
    %868 = vmatpush1.msra.mxu0 %v229
    %869 = vmatprep.subr.mxu0 0.0
    %870 = vmatpush1.msra.mxu0 %v228
    %871 = vmatprep.subr.mxu0 0.0
    %872 = vmatpush1.msra.mxu0 %v227
    %873 = vmatprep.subr.mxu0 0.0
    %874 = vmatpush2.msra.mxu0 0.0
    %875 = vmatprep.subr.mxu0 0.0
    %876 = vmatpush2.msra.mxu0 0.0
    %877 = vmatprep.subr.mxu0 0.0
    %878 = vmatpush2.msra.mxu0 0.0
    %879 = vmatprep.subr.mxu0 0.0
    %880 = vmatpush2.msra.mxu0 0.0
    %881 = vmatprep.subr.mxu0 0.0
    %882 = vmatpush2.msra.mxu0 0.0
    %883 = vmatprep.subr.mxu0 0.0
    %884 = vmatpush2.msra.mxu0 0.0
    %885 = vmatprep.subr.mxu0 0.0
    %886 = vmatpush2.msra.mxu0 0.0
    %887 = vmatprep.subr.mxu0 0.0
    %888 = vmatpush2.msra.mxu0 0.0
    %889 = vmatprep.subr.mxu0 0.0
    %890 = vmatpush2.msra.mxu0 0.0
    %891 = vmatprep.subr.mxu0 0.0
    %892 = vmatpush2.msra.mxu0 0.0
    %893 = vmatprep.subr.mxu0 0.0
    %894 = vmatpush2.msra.mxu0 0.0
    %895 = vmatprep.subr.mxu0 0.0
    %896 = vmatpush2.msra.mxu0 0.0
    %897 = vmatprep.subr.mxu0 0.0
    %898 = vmatpush2.msra.mxu0 0.0
    %899 = vmatprep.subr.mxu0 0.0
    %900 = vmatpush2.msra.mxu0 0.0
    %901 = vmatprep.subr.mxu0 0.0
    %902 = vmatpush2.msra.mxu0 0.0
    %903 = vmatprep.subr.mxu0 0.0
    %904 = vmatpush2.msra.mxu0 0.0
    %905 = vmatprep.mubr.f32.mxu0 0.0
    %906 = vmatmul.mubr.f32.gmra.mxu0 %v839
    %v907 = vpop.f32.mrf.mxu0
    %v908 = vadd.f32 0.0, %v907
    %v909 = vpop.f32.mrf.mxu0
    %910 = vdwg.mxu0
    %v911 = vadd.f32 %v219, %v908
    %v912 = vxor.u32 %v911, 2147483648
    %v913 = vmul.f32 %v912, 1.442695
    %v914 = vpow.pop %v913
    %v915 = vadd.f32 %v914, 1.0
    %v916 = vrcp.pop %v915
    %v917 = vmul.f32 1.0, %v916
    %v918 = vtanh.pop %v911
    %v919 = vmul.f32 %v917, %v829
    %921 = vrot.lane.b32.xlu0 %v918, 32
    %v922 = vpop.permute.xlu0 %921
    %v924 = vmul.f32 %v917, %v922
    %926 = vrot.lane.b32.xlu0 %v924, 32
    %v927 = vpop.permute.xlu0 %926
    %v929 = vadd.f32 %v919, %v927
    %v930 = vtanh.pop %v929
    %932 = vrot.lane.b32.xlu0 %v930, 32
    %v933 = vpop.permute.xlu0 %932
    %v935 = vmul.f32 %v917, %v933
    %937 = vrot.lane.b32.xlu0 %v935, 64
    %v938 = vpop.permute.xlu0 %937
    %v939 = vsel %vm233, %v938, 0
    %941 = vmatprep.subr.mxu0 0.0
    %942 = vmatpush1.msra.mxu0 0.0
    %943 = vmatprep.subr.mxu0 0.0
    %944 = vmatpush1.msra.mxu0 0.0
    %945 = vmatprep.subr.mxu0 0.0
    %946 = vmatpush1.msra.mxu0 0.0
    %947 = vmatprep.subr.mxu0 0.0
    %948 = vmatpush1.msra.mxu0 0.0
    %949 = vmatprep.subr.mxu0 0.0
    %950 = vmatpush1.msra.mxu0 0.0
    %951 = vmatprep.subr.mxu0 0.0
    %952 = vmatpush1.msra.mxu0 0.0
    %953 = vmatprep.subr.mxu0 0.0
    %954 = vmatpush1.msra.mxu0 0.0
    %955 = vmatprep.subr.mxu0 0.0
    %956 = vmatpush1.msra.mxu0 0.0
    %957 = vmatprep.subr.mxu0 0.0
    %958 = vmatpush1.msra.mxu0 0.0
    %959 = vmatprep.subr.mxu0 0.0
    %960 = vmatpush1.msra.mxu0 0.0
    %961 = vmatprep.subr.mxu0 0.0
    %962 = vmatpush1.msra.mxu0 0.0
    %963 = vmatprep.subr.mxu0 0.0
    %964 = vmatpush1.msra.mxu0 0.0
    %965 = vmatprep.subr.mxu0 0.0
    %966 = vmatpush1.msra.mxu0 %v230
    %967 = vmatprep.subr.mxu0 0.0
    %968 = vmatpush1.msra.mxu0 %v229
    %969 = vmatprep.subr.mxu0 0.0
    %970 = vmatpush1.msra.mxu0 %v228
    %971 = vmatprep.subr.mxu0 0.0
    %972 = vmatpush1.msra.mxu0 %v227
    %973 = vmatprep.subr.mxu0 0.0
    %974 = vmatpush2.msra.mxu0 0.0
    %975 = vmatprep.subr.mxu0 0.0
    %976 = vmatpush2.msra.mxu0 0.0
    %977 = vmatprep.subr.mxu0 0.0
    %978 = vmatpush2.msra.mxu0 0.0
    %979 = vmatprep.subr.mxu0 0.0
    %980 = vmatpush2.msra.mxu0 0.0
    %981 = vmatprep.subr.mxu0 0.0
    %982 = vmatpush2.msra.mxu0 0.0
    %983 = vmatprep.subr.mxu0 0.0
    %984 = vmatpush2.msra.mxu0 0.0
    %985 = vmatprep.subr.mxu0 0.0
    %986 = vmatpush2.msra.mxu0 0.0
    %987 = vmatprep.subr.mxu0 0.0
    %988 = vmatpush2.msra.mxu0 0.0
    %989 = vmatprep.subr.mxu0 0.0
    %990 = vmatpush2.msra.mxu0 0.0
    %991 = vmatprep.subr.mxu0 0.0
    %992 = vmatpush2.msra.mxu0 0.0
    %993 = vmatprep.subr.mxu0 0.0
    %994 = vmatpush2.msra.mxu0 0.0
    %995 = vmatprep.subr.mxu0 0.0
    %996 = vmatpush2.msra.mxu0 0.0
    %997 = vmatprep.subr.mxu0 0.0
    %998 = vmatpush2.msra.mxu0 0.0
    %999 = vmatprep.subr.mxu0 0.0
    %1000 = vmatpush2.msra.mxu0 0.0
    %1001 = vmatprep.subr.mxu0 0.0
    %1002 = vmatpush2.msra.mxu0 0.0
    %1003 = vmatprep.subr.mxu0 0.0
    %1004 = vmatpush2.msra.mxu0 0.0
    %1005 = vmatprep.mubr.f32.mxu0 0.0
    %1006 = vmatmul.mubr.f32.gmra.mxu0 %v939
    %v1007 = vpop.f32.mrf.mxu0
    %v1008 = vadd.f32 0.0, %v1007
    %v1009 = vpop.f32.mrf.mxu0
    %1010 = vdwg.mxu0
    %v1011 = vadd.f32 %v224, %v1008
    %v1012 = vxor.u32 %v1011, 2147483648
    %v1013 = vmul.f32 %v1012, 1.442695
    %v1014 = vpow.pop %v1013
    %v1015 = vadd.f32 %v1014, 1.0
    %v1016 = vrcp.pop %v1015
    %v1017 = vmul.f32 1.0, %v1016
    %v1018 = vtanh.pop %v1011
    %v1019 = vmul.f32 %v1017, %v929
    %1021 = vrot.lane.b32.xlu0 %v1018, 32
    %v1022 = vpop.permute.xlu0 %1021
    %v1024 = vmul.f32 %v1017, %v1022
    %1026 = vrot.lane.b32.xlu0 %v1024, 32
    %v1027 = vpop.permute.xlu0 %1026
    %v1029 = vadd.f32 %v1019, %v1027
    %v1030 = vtanh.pop %v1029
    %1032 = vrot.lane.b32.xlu0 %v1030, 32
    %v1033 = vpop.permute.xlu0 %1032
    %v1035 = vmul.f32 %v1017, %v1033
    %1037 = vrot.lane.b32.xlu0 %v1035, 64
    %v1038 = vpop.permute.xlu0 %1037
    %1040 = vst.msk [vmem:[#allocation9] sm:$0xff] %vm233, %v1038
    %1042 = vrot.lane.b32.xlu0 %v1029, 96
    %v1043 = vpop.permute.xlu0 %1042
    %1045 = vst.msk [vmem:[#allocation11] sm:$0xff] %vm233, %v1043
    %v1046 = vld [vmem:[%s6] sm:$0xff]
    %v1047 = vld [vmem:[%s6 + $0x8] sm:$0xff]
    %v1048 = vld [vmem:[%s6 + $0x10] sm:$0xff]
    %v1049 = vld [vmem:[%s6 + $0x18] sm:$0xff]
    %v1050 = vld [vmem:[%s7] sm:$0x1]
    %v1052 = vlaneseq
    %v1053 = vshrl.u32 %v1052, 7
    %v1054 = vsub.s32 0, %v1053
    %v1055 = vrot.slane %v1050, %v1054
    %v1057 = vsel %vm233, %v1038, 0
    %1059 = vmatprep.subr.mxu0 0.0
    %1060 = vmatpush1.msra.mxu0 0.0
    %1061 = vmatprep.subr.mxu0 0.0
    %1062 = vmatpush1.msra.mxu0 0.0
    %1063 = vmatprep.subr.mxu0 0.0
    %1064 = vmatpush1.msra.mxu0 0.0
    %1065 = vmatprep.subr.mxu0 0.0
    %1066 = vmatpush1.msra.mxu0 0.0
    %1067 = vmatprep.subr.mxu0 0.0
    %1068 = vmatpush1.msra.mxu0 0.0
    %1069 = vmatprep.subr.mxu0 0.0
    %1070 = vmatpush1.msra.mxu0 0.0
    %1071 = vmatprep.subr.mxu0 0.0
    %1072 = vmatpush1.msra.mxu0 0.0
    %1073 = vmatprep.subr.mxu0 0.0
    %1074 = vmatpush1.msra.mxu0 0.0
    %1075 = vmatprep.subr.mxu0 0.0
    %1076 = vmatpush1.msra.mxu0 0.0
    %1077 = vmatprep.subr.mxu0 0.0
    %1078 = vmatpush1.msra.mxu0 0.0
    %1079 = vmatprep.subr.mxu0 0.0
    %1080 = vmatpush1.msra.mxu0 0.0
    %1081 = vmatprep.subr.mxu0 0.0
    %1082 = vmatpush1.msra.mxu0 0.0
    %1083 = vmatprep.subr.mxu0 0.0
    %1084 = vmatpush1.msra.mxu0 %v1049
    %1085 = vmatprep.subr.mxu0 0.0
    %1086 = vmatpush1.msra.mxu0 %v1048
    %1087 = vmatprep.subr.mxu0 0.0
    %1088 = vmatpush1.msra.mxu0 %v1047
    %1089 = vmatprep.subr.mxu0 0.0
    %1090 = vmatpush1.msra.mxu0 %v1046
    %1091 = vmatprep.subr.mxu0 0.0
    %1092 = vmatpush2.msra.mxu0 0.0
    %1093 = vmatprep.subr.mxu0 0.0
    %1094 = vmatpush2.msra.mxu0 0.0
    %1095 = vmatprep.subr.mxu0 0.0
    %1096 = vmatpush2.msra.mxu0 0.0
    %1097 = vmatprep.subr.mxu0 0.0
    %1098 = vmatpush2.msra.mxu0 0.0
    %1099 = vmatprep.subr.mxu0 0.0
    %1100 = vmatpush2.msra.mxu0 0.0
    %1101 = vmatprep.subr.mxu0 0.0
    %1102 = vmatpush2.msra.mxu0 0.0
    %1103 = vmatprep.subr.mxu0 0.0
    %1104 = vmatpush2.msra.mxu0 0.0
    %1105 = vmatprep.subr.mxu0 0.0
    %1106 = vmatpush2.msra.mxu0 0.0
    %1107 = vmatprep.subr.mxu0 0.0
    %1108 = vmatpush2.msra.mxu0 0.0
    %1109 = vmatprep.subr.mxu0 0.0
    %1110 = vmatpush2.msra.mxu0 0.0
    %1111 = vmatprep.subr.mxu0 0.0
    %1112 = vmatpush2.msra.mxu0 0.0
    %1113 = vmatprep.subr.mxu0 0.0
    %1114 = vmatpush2.msra.mxu0 0.0
    %1115 = vmatprep.subr.mxu0 0.0
    %1116 = vmatpush2.msra.mxu0 0.0
    %1117 = vmatprep.subr.mxu0 0.0
    %1118 = vmatpush2.msra.mxu0 0.0
    %1119 = vmatprep.subr.mxu0 0.0
    %1120 = vmatpush2.msra.mxu0 0.0
    %1121 = vmatprep.subr.mxu0 0.0
    %1122 = vmatpush2.msra.mxu0 0.0
    %1123 = vmatprep.mubr.f32.mxu0 0.0
    %1124 = vmatmul.mubr.f32.gmra.mxu0 %v339
    %v1125 = vpop.f32.mrf.mxu0
    %v1126 = vadd.f32 %v1055, %v1125
    %v1127 = vpop.f32.mrf.mxu0
    %1128 = vmatprep.mubr.f32.mxu0 0.0
    %1129 = vmatmul.mubr.f32.gmra.mxu0 %v439
    %v1130 = vpop.f32.mrf.mxu0
    %v1131 = vadd.f32 %v1055, %v1130
    %v1132 = vpop.f32.mrf.mxu0
    %1133 = vmatprep.mubr.f32.mxu0 0.0
    %1134 = vmatmul.mubr.f32.gmra.mxu0 %v539
    %v1135 = vpop.f32.mrf.mxu0
    %v1136 = vadd.f32 %v1055, %v1135
    %v1137 = vpop.f32.mrf.mxu0
    %1138 = vmatprep.mubr.f32.mxu0 0.0
    %1139 = vmatmul.mubr.f32.gmra.mxu0 %v639
    %v1140 = vpop.f32.mrf.mxu0
    %v1141 = vadd.f32 %v1055, %v1140
    %v1142 = vpop.f32.mrf.mxu0
    %1143 = vmatprep.mubr.f32.mxu0 0.0
    %1144 = vmatmul.mubr.f32.gmra.mxu0 %v739
    %v1145 = vpop.f32.mrf.mxu0
    %v1146 = vadd.f32 %v1055, %v1145
    %v1147 = vpop.f32.mrf.mxu0
    %1148 = vmatprep.mubr.f32.mxu0 0.0
    %1149 = vmatmul.mubr.f32.gmra.mxu0 %v839
    %v1150 = vpop.f32.mrf.mxu0
    %v1151 = vadd.f32 %v1055, %v1150
    %v1152 = vpop.f32.mrf.mxu0
    %1153 = vmatprep.mubr.f32.mxu0 0.0
    %1154 = vmatmul.mubr.f32.gmra.mxu0 %v939
    %v1155 = vpop.f32.mrf.mxu0
    %v1156 = vadd.f32 %v1055, %v1155
    %v1157 = vpop.f32.mrf.mxu0
    %1158 = vmatprep.mubr.f32.mxu0 0.0
    %1159 = vmatmul.mubr.f32.gmra.mxu0 %v1057
    %v1160 = vpop.f32.mrf.mxu0
    %v1161 = vadd.f32 %v1055, %v1160
    %v1162 = vpop.f32.mrf.mxu0
    %1163 = vdwg.mxu0
    %vm1164 = vcmp.gt.f32.partialorder %v1126, 0.0
    %vm1165 = vcmp.gt.f32.partialorder %v1131, 0.0
    %vm1166 = vcmp.gt.f32.partialorder %v1136, 0.0
    %vm1167 = vcmp.gt.f32.partialorder %v1141, 0.0
    %vm1168 = vcmp.gt.f32.partialorder %v1146, 0.0
    %vm1169 = vcmp.gt.f32.partialorder %v1151, 0.0
    %vm1170 = vcmp.gt.f32.partialorder %v1156, 0.0
    %vm1171 = vcmp.gt.f32.partialorder %v1161, 0.0
    %v1172 = vmul.f32 %v1126, 0.01
    %v1173 = vmul.f32 %v1131, 0.01
    %v1174 = vmul.f32 %v1136, 0.01
    %v1175 = vmul.f32 %v1141, 0.01
    %v1176 = vmul.f32 %v1146, 0.01
    %v1177 = vmul.f32 %v1151, 0.01
    %v1178 = vmul.f32 %v1156, 0.01
    %v1179 = vmul.f32 %v1161, 0.01
    %v1180 = vsel %vm1164, %v1126, %v1172
    %v1181 = vsel %vm1165, %v1131, %v1173
    %v1182 = vsel %vm1166, %v1136, %v1174
    %v1183 = vsel %vm1167, %v1141, %v1175
    %v1184 = vsel %vm1168, %v1146, %v1176
    %v1185 = vsel %vm1169, %v1151, %v1177
    %v1186 = vsel %vm1170, %v1156, %v1178
    %v1187 = vsel %vm1171, %v1161, %v1179
    %v1188 = vld [vmem:[#allocation7] sm:$0xff]
    %v1189 = vld [vmem:[#allocation7 + $0x8] sm:$0xff]
    %v1190 = vld [vmem:[#allocation7 + $0x10] sm:$0xff]
    %v1191 = vld [vmem:[#allocation7 + $0x18] sm:$0xff]
    %v1192 = vld [vmem:[#allocation7 + $0x20] sm:$0xff]
    %v1193 = vld [vmem:[#allocation7 + $0x28] sm:$0xff]
    %v1194 = vld [vmem:[#allocation7 + $0x30] sm:$0xff]
    %v1195 = vld [vmem:[#allocation7 + $0x38] sm:$0xff]
    %v1196 = vld [vmem:[#allocation7 + $0x40] sm:$0xff]
    %v1197 = vld [vmem:[#allocation7 + $0x48] sm:$0xff]
    %v1198 = vld [vmem:[#allocation7 + $0x50] sm:$0xff]
    %v1199 = vld [vmem:[#allocation7 + $0x58] sm:$0xff]
    %v1200 = vld [vmem:[#allocation7 + $0x60] sm:$0xff]
    %v1201 = vld [vmem:[#allocation7 + $0x68] sm:$0xff]
    %v1202 = vld [vmem:[#allocation7 + $0x70] sm:$0xff]
    %v1203 = vld [vmem:[#allocation7 + $0x78] sm:$0xff]
    %v1204 = vld [vmem:[%s9] sm:$0x1]
    %v1206 = vlaneseq
    %v1207 = vshrl.u32 %v1206, 7
    %v1208 = vsub.s32 0, %v1207
    %v1209 = vrot.slane %v1204, %v1208
    %1211 = vmatprep.subr.mxu0 0.0
    %1212 = vmatpush1.msra.mxu0 %v1203
    %1213 = vmatprep.subr.mxu0 0.0
    %1214 = vmatpush1.msra.mxu0 %v1202
    %1215 = vmatprep.subr.mxu0 0.0
    %1216 = vmatpush1.msra.mxu0 %v1201
    %1217 = vmatprep.subr.mxu0 0.0
    %1218 = vmatpush1.msra.mxu0 %v1200
    %1219 = vmatprep.subr.mxu0 0.0
    %1220 = vmatpush1.msra.mxu0 %v1199
    %1221 = vmatprep.subr.mxu0 0.0
    %1222 = vmatpush1.msra.mxu0 %v1198
    %1223 = vmatprep.subr.mxu0 0.0
    %1224 = vmatpush1.msra.mxu0 %v1197
    %1225 = vmatprep.subr.mxu0 0.0
    %1226 = vmatpush1.msra.mxu0 %v1196
    %1227 = vmatprep.subr.mxu0 0.0
    %1228 = vmatpush1.msra.mxu0 %v1195
    %1229 = vmatprep.subr.mxu0 0.0
    %1230 = vmatpush1.msra.mxu0 %v1194
    %1231 = vmatprep.subr.mxu0 0.0
    %1232 = vmatpush1.msra.mxu0 %v1193
    %1233 = vmatprep.subr.mxu0 0.0
    %1234 = vmatpush1.msra.mxu0 %v1192
    %1235 = vmatprep.subr.mxu0 0.0
    %1236 = vmatpush1.msra.mxu0 %v1191
    %1237 = vmatprep.subr.mxu0 0.0
    %1238 = vmatpush1.msra.mxu0 %v1190
    %1239 = vmatprep.subr.mxu0 0.0
    %1240 = vmatpush1.msra.mxu0 %v1189
    %1241 = vmatprep.subr.mxu0 0.0
    %1242 = vmatpush1.msra.mxu0 %v1188
    %1243 = vmatprep.subr.mxu0 0.0
    %1244 = vmatpush2.msra.mxu0 0.0
    %1245 = vmatprep.subr.mxu0 0.0
    %1246 = vmatpush2.msra.mxu0 0.0
    %1247 = vmatprep.subr.mxu0 0.0
    %1248 = vmatpush2.msra.mxu0 0.0
    %1249 = vmatprep.subr.mxu0 0.0
    %1250 = vmatpush2.msra.mxu0 0.0
    %1251 = vmatprep.subr.mxu0 0.0
    %1252 = vmatpush2.msra.mxu0 0.0
    %1253 = vmatprep.subr.mxu0 0.0
    %1254 = vmatpush2.msra.mxu0 0.0
    %1255 = vmatprep.subr.mxu0 0.0
    %1256 = vmatpush2.msra.mxu0 0.0
    %1257 = vmatprep.subr.mxu0 0.0
    %1258 = vmatpush2.msra.mxu0 0.0
    %1259 = vmatprep.subr.mxu0 0.0
    %1260 = vmatpush2.msra.mxu0 0.0
    %1261 = vmatprep.subr.mxu0 0.0
    %1262 = vmatpush2.msra.mxu0 0.0
    %1263 = vmatprep.subr.mxu0 0.0
    %1264 = vmatpush2.msra.mxu0 0.0
    %1265 = vmatprep.subr.mxu0 0.0
    %1266 = vmatpush2.msra.mxu0 0.0
    %1267 = vmatprep.subr.mxu0 0.0
    %1268 = vmatpush2.msra.mxu0 0.0
    %1269 = vmatprep.subr.mxu0 0.0
    %1270 = vmatpush2.msra.mxu0 0.0
    %1271 = vmatprep.subr.mxu0 0.0
    %1272 = vmatpush2.msra.mxu0 0.0
    %1273 = vmatprep.subr.mxu0 0.0
    %1274 = vmatpush2.msra.mxu0 0.0
    %1275 = vmatprep.mubr.f32.mxu0 0.0
    %1276 = vmatmul.mubr.f32.gmra.mxu0 %v1180
    %v1277 = vpop.f32.mrf.mxu0
    %v1278 = vadd.f32 %v1209, %v1277
    %v1279 = vpop.f32.mrf.mxu0
    %1280 = vmatprep.mubr.f32.mxu0 0.0
    %1281 = vmatmul.mubr.f32.gmra.mxu0 %v1181
    %v1282 = vpop.f32.mrf.mxu0
    %v1283 = vadd.f32 %v1209, %v1282
    %v1284 = vpop.f32.mrf.mxu0
    %1285 = vmatprep.mubr.f32.mxu0 0.0
    %1286 = vmatmul.mubr.f32.gmra.mxu0 %v1182
    %v1287 = vpop.f32.mrf.mxu0
    %v1288 = vadd.f32 %v1209, %v1287
    %v1289 = vpop.f32.mrf.mxu0
    %1290 = vmatprep.mubr.f32.mxu0 0.0
    %1291 = vmatmul.mubr.f32.gmra.mxu0 %v1183
    %v1292 = vpop.f32.mrf.mxu0
    %v1293 = vadd.f32 %v1209, %v1292
    %v1294 = vpop.f32.mrf.mxu0
    %1295 = vmatprep.mubr.f32.mxu0 0.0
    %1296 = vmatmul.mubr.f32.gmra.mxu0 %v1184
    %v1297 = vpop.f32.mrf.mxu0
    %v1298 = vadd.f32 %v1209, %v1297
    %v1299 = vpop.f32.mrf.mxu0
    %1300 = vmatprep.mubr.f32.mxu0 0.0
    %1301 = vmatmul.mubr.f32.gmra.mxu0 %v1185
    %v1302 = vpop.f32.mrf.mxu0
    %v1303 = vadd.f32 %v1209, %v1302
    %v1304 = vpop.f32.mrf.mxu0
    %1305 = vmatprep.mubr.f32.mxu0 0.0
    %1306 = vmatmul.mubr.f32.gmra.mxu0 %v1186
    %v1307 = vpop.f32.mrf.mxu0
    %v1308 = vadd.f32 %v1209, %v1307
    %v1309 = vpop.f32.mrf.mxu0
    %1310 = vmatprep.mubr.f32.mxu0 0.0
    %1311 = vmatmul.mubr.f32.gmra.mxu0 %v1187
    %v1312 = vpop.f32.mrf.mxu0
    %v1313 = vadd.f32 %v1209, %v1312
    %v1314 = vpop.f32.mrf.mxu0
    %1315 = vdwg.mxu0
    %1316 = vst [vmem:[#allocation8] sm:$0xff] %v1278
    %1317 = vst [vmem:[#allocation8 + $0x8] sm:$0xff] %v1283
    %1318 = vst [vmem:[#allocation8 + $0x10] sm:$0xff] %v1288
    %1319 = vst [vmem:[#allocation8 + $0x18] sm:$0xff] %v1293
    %1320 = vst [vmem:[#allocation8 + $0x20] sm:$0xff] %v1298
    %1321 = vst [vmem:[#allocation8 + $0x28] sm:$0xff] %v1303
    %1322 = vst [vmem:[#allocation8 + $0x30] sm:$0xff] %v1308
    %1323 = vst [vmem:[#allocation8 + $0x38] sm:$0xff] %v1313
    // Predicated region
    $region54: #{tpu_custom_call.1} parent=1 // pred_check
      _
    $region55: #{tpu_custom_call.1} parent=1 // pred_check_branch
      %1325 = sbr.rel (0) target = $region57
    $region56: #{tpu_custom_call.1} parent=1 // pred_region
      %s1327 = ssub.s32 1024, 1024
      %1328 = vsyncadd [#allocation4], %s1327
      %s1329 = sshll.u32 [#allocation8], 4
      %s1330 = int_to_ptr.vmem [resolvable:$true] %s1329
      %1335 = dma.vmem_to_hbm [thread:$0]  %s1330, 1024, %s10, [#allocation4], 128, 128, 8
    $region57: #{tpu_custom_call.1} parent=1 // pred_fallthru
      _
    // Predicated region
    $region58: #{tpu_custom_call.1} parent=1 // pred_check
      _
    $region59: #{tpu_custom_call.1} parent=1 // pred_check_branch
      %1337 = sbr.rel (0) target = $region61
    $region60: #{tpu_custom_call.1} parent=1 // pred_region
      %s1339 = ssub.s32 128, 128
      %1340 = vsyncadd [#allocation10], %s1339
      %s1342 = sshll.u32 [#allocation9], 4
      %s1343 = int_to_ptr.vmem [resolvable:$true] %s1342
      %1345 = dma.vmem_to_hbm [thread:$0]  %s1343, 128, %s11, [#allocation10]
    $region61: #{tpu_custom_call.1} parent=1 // pred_fallthru
      _
    // Predicated region
    $region62: #{tpu_custom_call.1} parent=1 // pred_check
      _
    $region63: #{tpu_custom_call.1} parent=1 // pred_check_branch
      %1347 = sbr.rel (0) target = $region65
    $region64: #{tpu_custom_call.1} parent=1 // pred_region
      %s1349 = ssub.s32 128, 128
      %1350 = vsyncadd [#allocation10], %s1349
      %s1352 = sshll.u32 [#allocation11], 4
      %s1353 = int_to_ptr.vmem [resolvable:$true] %s1352
      %1355 = dma.vmem_to_hbm [thread:$0]  %s1353, 128, %s12, [#allocation10]
    $region65: #{tpu_custom_call.1} parent=1 // pred_fallthru
      _
    // Predicated region
    $region66: #{tpu_custom_call.1} parent=1 // pred_check
      _
    $region67: #{tpu_custom_call.1} parent=1 // pred_check_branch
      %1357 = sbr.rel (0) target = $region69
    $region68: #{tpu_custom_call.1} parent=1 // pred_region
      %1358 = dma.done [#allocation4], 1024
    $region69: #{tpu_custom_call.1} parent=1 // pred_fallthru
      _
    // Predicated region
    $region70: #{tpu_custom_call.1} parent=1 // pred_check
      _
    $region71: #{tpu_custom_call.1} parent=1 // pred_check_branch
      %1360 = sbr.rel (0) target = $region73
    $region72: #{tpu_custom_call.1} parent=1 // pred_region
      %1361 = dma.done [#allocation10], 128
    $region73: #{tpu_custom_call.1} parent=1 // pred_fallthru
      _
    // Predicated region
    $region74: #{tpu_custom_call.1} parent=1 // pred_check
      _
    $region75: #{tpu_custom_call.1} parent=1 // pred_check_branch
      %1363 = sbr.rel (0) target = $region77
    $region76: #{tpu_custom_call.1} parent=1 // pred_region
      %1364 = dma.done [#allocation10], 128
    $region77: #{tpu_custom_call.1} parent=1 // pred_fallthru
      _
    %1365 = vsyncpa [#allocation3], 1
    %1366 = vsyncpa [#allocation6], 1
    %1367 = vsyncpa [#allocation4], 1
    %1368 = vsyncpa [#allocation10], 1

</llo_original>
